<compile_context>
chip_gen: v7x
topology: tpu7x:2x2x1
jax: 0.10.0
libtpu: 0.0.40
codegen_flags: <defaults>
</compile_context>

<pallas_src>
import functools

import numpy as np
import jax
import jax.numpy as jnp
from jax.experimental import pallas as pl
from jax.experimental.pallas import tpu as pltpu

ALPHA = 0.1  # LeakyReLU negative slope


# ----------------------------------------------------------------------------
# The single fused kernel
# ----------------------------------------------------------------------------
def _net_kernel(x_ref, a1_ref, b1_ref, a2_ref, b2_ref,
                wf1_ref, bf1_ref, wf2_ref, bf2_ref,
                o_ref, *, batch):
    B = batch

    # ---- Conv1(2->32, 3x3) + LeakyReLU(0.1) + MaxPool 2x2 (fused) ----------
    # x_ref[ki] is (8B, 36): row p*4B + r*B + b holds input row h = 2r + p + ki
    # of batch b (NHWC, col = w*2 + c).  One accumulating dot per kernel row.
    acc1 = None
    for ki in range(3):
        t = jnp.dot(x_ref[ki], a1_ref[ki],
                    preferred_element_type=jnp.float32)        # (8B, 512)
        acc1 = t if acc1 is None else acc1 + t
    hmax1 = jnp.maximum(acc1[:4 * B, :], acc1[4 * B:, :])      # max over ho parity
    wmax1 = jnp.maximum(hmax1[:, :256], hmax1[:, 256:])        # max over wo parity
    # bias is constant over the pooled window and LeakyReLU is monotone, so
    # bias + activation after the max is exactly equal.
    p1 = wmax1 + b1_ref[...]
    p1 = jnp.where(p1 > 0, p1, ALPHA * p1)                     # (4B, 256), row r*B+b

    # ---- Conv2(32->64, 3x3) (no activation) + MaxPool 2x2 (fused) ----------
    # LHS for kernel row ki is a contiguous slice of p1 (rows r=ki, ki+1 for
    # all batches); result row j*B + b = conv2 output row j of batch b.
    acc2 = None
    for ki in range(3):
        t = jnp.dot(p1[ki * B:(ki + 2) * B, :], a2_ref[ki],
                    preferred_element_type=jnp.float32)        # (2B, 448)
        acc2 = t if acc2 is None else acc2 + t
    hmax2 = jnp.maximum(acc2[:B, :], acc2[B:, :])              # (B, 448)
    wmax2 = jnp.maximum(hmax2[:, :192], hmax2[:, 256:448])     # (B, 192)
    feats = wmax2 + b2_ref[...]                                # flattened features

    # ---- FC head (batched over all rows) -----------------------------------
    h = jnp.dot(feats, wf1_ref[...],
                preferred_element_type=jnp.float32) + bf1_ref[...]   # (B, 64)
    h = jnp.where(h > 0, h, ALPHA * h)                               # LeakyReLU
    y = jnp.dot(h, wf2_ref[...],
                preferred_element_type=jnp.float32) + bf2_ref[...]   # (B, 5)
    y = jnp.where(y > 0, y, ALPHA * y)                               # LeakyReLU
    # softmax(dim=1), divide on the EUP
    y = y - jnp.max(y, axis=-1, keepdims=True)
    e = jnp.exp(y)
    inv = pl.reciprocal(jnp.sum(e, axis=-1, keepdims=True), approx=True)
    o_ref[...] = (e * inv).astype(o_ref.dtype)


# ----------------------------------------------------------------------------
# Parameter init (PyTorch-default style uniform(+-1/sqrt(fan_in)))
# ----------------------------------------------------------------------------
def init_params(key):
    ks = jax.random.split(key, 8)

    def u(k, shape, fan_in):
        bound = 1.0 / float(fan_in) ** 0.5
        return jax.random.uniform(k, shape, jnp.float32, -bound, bound)

    return dict(
        w1=u(ks[0], (32, 2, 3, 3), 2 * 9), b1=u(ks[1], (32,), 2 * 9),
        w2=u(ks[2], (64, 32, 3, 3), 32 * 9), b2=u(ks[3], (64,), 32 * 9),
        wf1=u(ks[4], (64, 192), 192), bf1=u(ks[5], (64,), 192),
        wf2=u(ks[6], (5, 64), 64), bf2=u(ks[7], (5,), 64),
    )


# ----------------------------------------------------------------------------
# One-time weight repacking (runs once at init, not per forward call)
# ----------------------------------------------------------------------------
def pack_params(params):
    w1 = np.asarray(params["w1"], np.float32)    # (32, 2, 3, 3)  OIHW
    b1 = np.asarray(params["b1"], np.float32)
    w2 = np.asarray(params["w2"], np.float32)    # (64, 32, 3, 3)
    b2 = np.asarray(params["b2"], np.float32)
    wf1 = np.asarray(params["wf1"], np.float32)  # (64, 192)
    bf1 = np.asarray(params["bf1"], np.float32)
    wf2 = np.asarray(params["wf2"], np.float32)  # (5, 64)
    bf2 = np.asarray(params["bf2"], np.float32)

    # conv1 banded weights:
    #   a1[ki][w*2 + c, (wo%2)*256 + (wo//2)*32 + co] = w1[co, c, ki, w - wo]
    a1 = np.zeros((3, 36, 512), np.float32)
    for ki in range(3):
        for kj in range(3):
            blk = w1[:, :, ki, kj].T                     # (c=2, co=32)
            for wo in range(16):
                r0 = (wo + kj) * 2
                c0 = (wo % 2) * 256 + (wo // 2) * 32
                a1[ki, r0:r0 + 2, c0:c0 + 32] = blk
    b1c = np.tile(b1, 8)[None, :]                        # (1, 256): col = wo2*32 + co

    # conv2 banded weights (odd-ow block starts at 256 so both pool slices
    # begin on a lane-aligned boundary):
    #   a2[ki][w*32 + c, (ow%2)*256 + (ow//2)*64 + oc] = w2[oc, c, ki, w - ow]
    a2 = np.zeros((3, 256, 448), np.float32)
    for ki in range(3):
        for kj in range(3):
            blk = w2[:, :, ki, kj].T                     # (c=32, oc=64)
            for ow in range(6):
                r0 = (ow + kj) * 32
                c0 = (ow % 2) * 256 + (ow // 2) * 64
                a2[ki, r0:r0 + 32, c0:c0 + 64] = blk
    b2c = np.tile(b2, 3)[None, :]                        # (1, 192): col = ow2*64 + oc

    # fc1: kernel feature order f = ow2*64 + oc; PyTorch flatten order oc*3 + ow2.
    wf1p = wf1.T.reshape(64, 3, 64).transpose(1, 0, 2).reshape(192, 64)

    return dict(
        a1=jnp.asarray(a1), b1=jnp.asarray(b1c),
        a2=jnp.asarray(a2), b2=jnp.asarray(b2c),
        wf1=jnp.asarray(wf1p), bf1=jnp.asarray(bf1[None, :]),
        wf2=jnp.asarray(wf2.T), bf2=jnp.asarray(bf2[None, :]),
    )


# ----------------------------------------------------------------------------
# Forward pass (== torch.softmax(Net.model(x), dim=1)), single pallas_call
# ----------------------------------------------------------------------------
def net_forward(packed, x_nchw):
    B = x_nchw.shape[0]
    # Tiny input-only relayout (pure XLA on a tiny tensor):
    #   NCHW -> NHWC, then one (8B, 36) plane per conv1 kernel-row ki whose
    #   row p*4B + r*B + b holds input row h = 2r + p + ki of batch b
    #   (col = w*2 + c).  Everything the kernel slices is then contiguous.
    x = jnp.transpose(x_nchw, (0, 2, 3, 1)).astype(jnp.float32)     # (B,10,18,2)
    xr = x.reshape(B, 10, 36)
    planes = []
    for ki in range(3):
        blks = []
        for p in range(2):
            s = ki + p
            blk = xr[:, s:s + 7:2, :]                               # (B,4,36): h=2r+p+ki
            blks.append(jnp.transpose(blk, (1, 0, 2)).reshape(4 * B, 36))
        planes.append(jnp.concatenate(blks, axis=0))                # (8B, 36)
    xk = jnp.stack(planes, axis=0)                                  # (3, 8B, 36)

    vmem = functools.partial(pl.BlockSpec, memory_space=pltpu.MemorySpace.VMEM)
    return pl.pallas_call(
        functools.partial(_net_kernel, batch=B),
        out_shape=jax.ShapeDtypeStruct((B, 5), jnp.float32),
        in_specs=[vmem()] * 9,
        out_specs=vmem(),
    )(xk, packed["a1"], packed["b1"], packed["a2"], packed["b2"],
      packed["wf1"], packed["bf1"], packed["wf2"], packed["bf2"])


# ----------------------------------------------------------------------------
# Pure-JAX (XLA) reference, mirroring the PyTorch module exactly
# ----------------------------------------------------------------------------
def reference_forward(params, x_nchw):
    def leaky(v):
        return jnp.where(v > 0, v, ALPHA * v)

    def pool(v):
        return jax.lax.reduce_window(v, -jnp.inf, jax.lax.max,
                                     (1, 1, 2, 2), (1, 1, 2, 2), "VALID")

    dn = ("NCHW", "OIHW", "NCHW")
    x = x_nchw.astype(jnp.float32)
    h = jax.lax.conv_general_dilated(x, params["w1"], (1, 1), "VALID",
                                     dimension_numbers=dn)
    h = pool(leaky(h + params["b1"][None, :, None, None]))
    h = jax.lax.conv_general_dilated(h, params["w2"], (1, 1), "VALID",
                                     dimension_numbers=dn)
    h = pool(h + params["b2"][None, :, None, None])
    h = h.reshape(h.shape[0], 192)            # NCHW flatten == Resize(-1, 192)
    h = leaky(h @ params["wf1"].T + params["bf1"])
    h = leaky(h @ params["wf2"].T + params["bf2"])
    return jax.nn.softmax(h, axis=1)


if __name__ == "__main__":
    key = jax.random.PRNGKey(0)
    pkey, xkey = jax.random.split(key)
    params = init_params(pkey)
    packed = pack_params(params)             # one-time weight repack

    # NCHW input: batch=2, channels=2, H=10, W=18 (gives 192 flat features).
    x = jax.random.normal(xkey, (2, 2, 10, 18), jnp.float32)

    out = jax.block_until_ready(jax.jit(net_forward)(packed, x))
    ref = jax.block_until_ready(jax.jit(reference_forward)(params, x))

    assert out.shape == (2, 5), out.shape
    assert bool(jnp.all(jnp.isfinite(out)))
    assert bool(jnp.allclose(jnp.sum(out, axis=1), 1.0, atol=5e-3))
    assert bool(jnp.allclose(out, ref, atol=5e-3)), (out, ref)
    print("KERNEL_OK")
</pallas_src>

<mosaic_0001>
module attributes {stable_mosaic.version = 11 : i64} {
  func.func @_net_kernel(%arg0: memref<3x16x36xf32, #tpu.memory_space<vmem>>, %arg1: memref<3x36x512xf32, #tpu.memory_space<vmem>>, %arg2: memref<1x256xf32, #tpu.memory_space<vmem>>, %arg3: memref<3x256x448xf32, #tpu.memory_space<vmem>>, %arg4: memref<1x192xf32, #tpu.memory_space<vmem>>, %arg5: memref<192x64xf32, #tpu.memory_space<vmem>>, %arg6: memref<1x64xf32, #tpu.memory_space<vmem>>, %arg7: memref<64x5xf32, #tpu.memory_space<vmem>>, %arg8: memref<1x5xf32, #tpu.memory_space<vmem>>, %arg9: memref<2x5xf32, #tpu.memory_space<vmem>>) attributes {dimension_semantics = [], scalar_prefetch = 0 : i64, scratch_operands = 0 : i64, tpu.core_type = #tpu.core_type<tc>} {
    %c0 = arith.constant 0 : index
    %c0_0 = arith.constant 0 : index
    %c0_1 = arith.constant 0 : index
    %0 = vector.load %arg0[%c0, %c0_0, %c0_1] : memref<3x16x36xf32, #tpu.memory_space<vmem>>, vector<1x16x36xf32>
    %1 = vector.shape_cast %0 : vector<1x16x36xf32> to vector<16x36xf32>
    %c0_2 = arith.constant 0 : index
    %c0_3 = arith.constant 0 : index
    %c0_4 = arith.constant 0 : index
    %2 = vector.load %arg1[%c0_2, %c0_3, %c0_4] : memref<3x36x512xf32, #tpu.memory_space<vmem>>, vector<1x36x512xf32>
    %3 = vector.shape_cast %2 : vector<1x36x512xf32> to vector<36x512xf32>
    %cst = arith.constant dense<0.000000e+00> : vector<16x512xf32>
    %4 = tpu.matmul %1, %3, %cst {dimension_numbers = #tpu.dot_dimension_numbers<[1], [0], [0], [1], [0, 0, 1, 1], [], []>} : vector<16x36xf32>, vector<36x512xf32>, vector<16x512xf32> -> vector<16x512xf32>
    %c1 = arith.constant 1 : index
    %c0_5 = arith.constant 0 : index
    %c0_6 = arith.constant 0 : index
    %5 = vector.load %arg0[%c1, %c0_5, %c0_6] : memref<3x16x36xf32, #tpu.memory_space<vmem>>, vector<1x16x36xf32>
    %6 = vector.shape_cast %5 : vector<1x16x36xf32> to vector<16x36xf32>
    %c1_7 = arith.constant 1 : index
    %c0_8 = arith.constant 0 : index
    %c0_9 = arith.constant 0 : index
    %7 = vector.load %arg1[%c1_7, %c0_8, %c0_9] : memref<3x36x512xf32, #tpu.memory_space<vmem>>, vector<1x36x512xf32>
    %8 = vector.shape_cast %7 : vector<1x36x512xf32> to vector<36x512xf32>
    %cst_10 = arith.constant dense<0.000000e+00> : vector<16x512xf32>
    %9 = tpu.matmul %6, %8, %cst_10 {dimension_numbers = #tpu.dot_dimension_numbers<[1], [0], [0], [1], [0, 0, 1, 1], [], []>} : vector<16x36xf32>, vector<36x512xf32>, vector<16x512xf32> -> vector<16x512xf32>
    %10 = arith.addf %4, %9 : vector<16x512xf32>
    %c2 = arith.constant 2 : index
    %c0_11 = arith.constant 0 : index
    %c0_12 = arith.constant 0 : index
    %11 = vector.load %arg0[%c2, %c0_11, %c0_12] : memref<3x16x36xf32, #tpu.memory_space<vmem>>, vector<1x16x36xf32>
    %12 = vector.shape_cast %11 : vector<1x16x36xf32> to vector<16x36xf32>
    %c2_13 = arith.constant 2 : index
    %c0_14 = arith.constant 0 : index
    %c0_15 = arith.constant 0 : index
    %13 = vector.load %arg1[%c2_13, %c0_14, %c0_15] : memref<3x36x512xf32, #tpu.memory_space<vmem>>, vector<1x36x512xf32>
    %14 = vector.shape_cast %13 : vector<1x36x512xf32> to vector<36x512xf32>
    %cst_16 = arith.constant dense<0.000000e+00> : vector<16x512xf32>
    %15 = tpu.matmul %12, %14, %cst_16 {dimension_numbers = #tpu.dot_dimension_numbers<[1], [0], [0], [1], [0, 0, 1, 1], [], []>} : vector<16x36xf32>, vector<36x512xf32>, vector<16x512xf32> -> vector<16x512xf32>
    %16 = arith.addf %10, %15 : vector<16x512xf32>
    %17 = vector.extract_strided_slice %16 {offsets = [0, 0], sizes = [8, 512], strides = [1, 1]} : vector<16x512xf32> to vector<8x512xf32>
    %18 = vector.extract_strided_slice %16 {offsets = [8, 0], sizes = [8, 512], strides = [1, 1]} : vector<16x512xf32> to vector<8x512xf32>
    %19 = arith.maximumf %17, %18 : vector<8x512xf32>
    %20 = vector.extract_strided_slice %19 {offsets = [0, 0], sizes = [8, 256], strides = [1, 1]} : vector<8x512xf32> to vector<8x256xf32>
    %21 = vector.extract_strided_slice %19 {offsets = [0, 256], sizes = [8, 256], strides = [1, 1]} : vector<8x512xf32> to vector<8x256xf32>
    %22 = arith.maximumf %20, %21 : vector<8x256xf32>
    %c0_17 = arith.constant 0 : index
    %c0_18 = arith.constant 0 : index
    %23 = vector.load %arg2[%c0_17, %c0_18] : memref<1x256xf32, #tpu.memory_space<vmem>>, vector<1x256xf32>
    %24 = vector.broadcast %23 : vector<1x256xf32> to vector<8x256xf32>
    %25 = arith.addf %22, %24 : vector<8x256xf32>
    %cst_19 = arith.constant 0.000000e+00 : f32
    %26 = vector.broadcast %cst_19 : f32 to vector<8x256xf32>
    %27 = arith.cmpf ogt, %25, %26 : vector<8x256xf32>
    %cst_20 = arith.constant 1.000000e-01 : f32
    %28 = vector.broadcast %cst_20 : f32 to vector<8x256xf32>
    %29 = arith.mulf %28, %25 : vector<8x256xf32>
    %30 = arith.select %27, %25, %29 : vector<8x256xi1>, vector<8x256xf32>
    %31 = vector.extract_strided_slice %30 {offsets = [0, 0], sizes = [4, 256], strides = [1, 1]} : vector<8x256xf32> to vector<4x256xf32>
    %c0_21 = arith.constant 0 : index
    %c0_22 = arith.constant 0 : index
    %c0_23 = arith.constant 0 : index
    %32 = vector.load %arg3[%c0_21, %c0_22, %c0_23] : memref<3x256x448xf32, #tpu.memory_space<vmem>>, vector<1x256x448xf32>
    %33 = vector.shape_cast %32 : vector<1x256x448xf32> to vector<256x448xf32>
    %cst_24 = arith.constant dense<0.000000e+00> : vector<4x448xf32>
    %34 = tpu.matmul %31, %33, %cst_24 {dimension_numbers = #tpu.dot_dimension_numbers<[1], [0], [0], [1], [0, 0, 1, 1], [], []>} : vector<4x256xf32>, vector<256x448xf32>, vector<4x448xf32> -> vector<4x448xf32>
    %35 = vector.extract_strided_slice %30 {offsets = [2, 0], sizes = [4, 256], strides = [1, 1]} : vector<8x256xf32> to vector<4x256xf32>
    %c1_25 = arith.constant 1 : index
    %c0_26 = arith.constant 0 : index
    %c0_27 = arith.constant 0 : index
    %36 = vector.load %arg3[%c1_25, %c0_26, %c0_27] : memref<3x256x448xf32, #tpu.memory_space<vmem>>, vector<1x256x448xf32>
    %37 = vector.shape_cast %36 : vector<1x256x448xf32> to vector<256x448xf32>
    %cst_28 = arith.constant dense<0.000000e+00> : vector<4x448xf32>
    %38 = tpu.matmul %35, %37, %cst_28 {dimension_numbers = #tpu.dot_dimension_numbers<[1], [0], [0], [1], [0, 0, 1, 1], [], []>} : vector<4x256xf32>, vector<256x448xf32>, vector<4x448xf32> -> vector<4x448xf32>
    %39 = arith.addf %34, %38 : vector<4x448xf32>
    %40 = vector.extract_strided_slice %30 {offsets = [4, 0], sizes = [4, 256], strides = [1, 1]} : vector<8x256xf32> to vector<4x256xf32>
    %c2_29 = arith.constant 2 : index
    %c0_30 = arith.constant 0 : index
    %c0_31 = arith.constant 0 : index
    %41 = vector.load %arg3[%c2_29, %c0_30, %c0_31] : memref<3x256x448xf32, #tpu.memory_space<vmem>>, vector<1x256x448xf32>
    %42 = vector.shape_cast %41 : vector<1x256x448xf32> to vector<256x448xf32>
    %cst_32 = arith.constant dense<0.000000e+00> : vector<4x448xf32>
    %43 = tpu.matmul %40, %42, %cst_32 {dimension_numbers = #tpu.dot_dimension_numbers<[1], [0], [0], [1], [0, 0, 1, 1], [], []>} : vector<4x256xf32>, vector<256x448xf32>, vector<4x448xf32> -> vector<4x448xf32>
    %44 = arith.addf %39, %43 : vector<4x448xf32>
    %45 = vector.extract_strided_slice %44 {offsets = [0, 0], sizes = [2, 448], strides = [1, 1]} : vector<4x448xf32> to vector<2x448xf32>
    %46 = vector.extract_strided_slice %44 {offsets = [2, 0], sizes = [2, 448], strides = [1, 1]} : vector<4x448xf32> to vector<2x448xf32>
    %47 = arith.maximumf %45, %46 : vector<2x448xf32>
    %48 = vector.extract_strided_slice %47 {offsets = [0, 0], sizes = [2, 192], strides = [1, 1]} : vector<2x448xf32> to vector<2x192xf32>
    %49 = vector.extract_strided_slice %47 {offsets = [0, 256], sizes = [2, 192], strides = [1, 1]} : vector<2x448xf32> to vector<2x192xf32>
    %50 = arith.maximumf %48, %49 : vector<2x192xf32>
    %c0_33 = arith.constant 0 : index
    %c0_34 = arith.constant 0 : index
    %51 = vector.load %arg4[%c0_33, %c0_34] : memref<1x192xf32, #tpu.memory_space<vmem>>, vector<1x192xf32>
    %52 = vector.broadcast %51 : vector<1x192xf32> to vector<2x192xf32>
    %53 = arith.addf %50, %52 : vector<2x192xf32>
    %c0_35 = arith.constant 0 : index
    %c0_36 = arith.constant 0 : index
    %54 = vector.load %arg5[%c0_35, %c0_36] : memref<192x64xf32, #tpu.memory_space<vmem>>, vector<192x64xf32>
    %cst_37 = arith.constant dense<0.000000e+00> : vector<2x64xf32>
    %55 = tpu.matmul %53, %54, %cst_37 {dimension_numbers = #tpu.dot_dimension_numbers<[1], [0], [0], [1], [0, 0, 1, 1], [], []>} : vector<2x192xf32>, vector<192x64xf32>, vector<2x64xf32> -> vector<2x64xf32>
    %c0_38 = arith.constant 0 : index
    %c0_39 = arith.constant 0 : index
    %56 = vector.load %arg6[%c0_38, %c0_39] : memref<1x64xf32, #tpu.memory_space<vmem>>, vector<1x64xf32>
    %57 = vector.broadcast %56 : vector<1x64xf32> to vector<2x64xf32>
    %58 = arith.addf %55, %57 : vector<2x64xf32>
    %cst_40 = arith.constant 0.000000e+00 : f32
    %59 = vector.broadcast %cst_40 : f32 to vector<2x64xf32>
    %60 = arith.cmpf ogt, %58, %59 : vector<2x64xf32>
    %cst_41 = arith.constant 1.000000e-01 : f32
    %61 = vector.broadcast %cst_41 : f32 to vector<2x64xf32>
    %62 = arith.mulf %61, %58 : vector<2x64xf32>
    %63 = arith.select %60, %58, %62 : vector<2x64xi1>, vector<2x64xf32>
    %c0_42 = arith.constant 0 : index
    %c0_43 = arith.constant 0 : index
    %64 = vector.load %arg7[%c0_42, %c0_43] : memref<64x5xf32, #tpu.memory_space<vmem>>, vector<64x5xf32>
    %cst_44 = arith.constant dense<0.000000e+00> : vector<2x5xf32>
    %65 = tpu.matmul %63, %64, %cst_44 {dimension_numbers = #tpu.dot_dimension_numbers<[1], [0], [0], [1], [0, 0, 1, 1], [], []>} : vector<2x64xf32>, vector<64x5xf32>, vector<2x5xf32> -> vector<2x5xf32>
    %c0_45 = arith.constant 0 : index
    %c0_46 = arith.constant 0 : index
    %66 = vector.load %arg8[%c0_45, %c0_46] : memref<1x5xf32, #tpu.memory_space<vmem>>, vector<1x5xf32>
    %67 = vector.broadcast %66 : vector<1x5xf32> to vector<2x5xf32>
    %68 = arith.addf %65, %67 : vector<2x5xf32>
    %cst_47 = arith.constant 0.000000e+00 : f32
    %69 = vector.broadcast %cst_47 : f32 to vector<2x5xf32>
    %70 = arith.cmpf ogt, %68, %69 : vector<2x5xf32>
    %cst_48 = arith.constant 1.000000e-01 : f32
    %71 = vector.broadcast %cst_48 : f32 to vector<2x5xf32>
    %72 = arith.mulf %71, %68 : vector<2x5xf32>
    %73 = arith.select %70, %68, %72 : vector<2x5xi1>, vector<2x5xf32>
    %cst_49 = arith.constant dense<0xFF800000> : vector<2xf32>
    %74 = vector.multi_reduction <maximumf>, %73, %cst_49 [1] : vector<2x5xf32> to vector<2xf32>
    %75 = vector.shape_cast %74 : vector<2xf32> to vector<2x1xf32>
    %76 = vector.broadcast %75 : vector<2x1xf32> to vector<2x5xf32>
    %77 = arith.subf %73, %76 : vector<2x5xf32>
    %78 = math.exp %77 : vector<2x5xf32>
    %cst_50 = arith.constant dense<0.000000e+00> : vector<2xf32>
    %79 = vector.multi_reduction <add>, %78, %cst_50 [1] : vector<2x5xf32> to vector<2xf32>
    %80 = vector.shape_cast %79 : vector<2xf32> to vector<2x1xf32>
    %81 = tpu.reciprocal %80 {approx = true} : vector<2x1xf32> -> vector<2x1xf32>
    %82 = vector.broadcast %81 : vector<2x1xf32> to vector<2x5xf32>
    %83 = arith.mulf %78, %82 : vector<2x5xf32>
    %c0_51 = arith.constant 0 : index
    %c0_52 = arith.constant 0 : index
    %84 = vector.load %arg9[%c0_51, %c0_52] : memref<2x5xf32, #tpu.memory_space<vmem>>, vector<2x5xf32>
    tpu.vector_store %arg9[%c0_51, %c0_52], %83 {strides = array<i32>} : memref<2x5xf32, #tpu.memory_space<vmem>>, vector<2x5xf32>,
    return
  }
}

</mosaic_0001>

<llo_original>
// kernel: net_forward.1
$region0: #{net_forward.1}
  #allocation0 [shape = 'u32[]', space=smem, size = 0x4, offset = 0x4, fixed_abs, tag = 'smem constant byte address 0x4 - core index']
  #allocation1 [shape = 'u32[144,128]{1,0:T(1,128)}', space=vmem, size = 0x12000, scoped, tag = 'internal scratch']
  %s0 = inlined_call_operand.vmem [shape: f32[3,16,36], index: 0, kind: input, shape index: {}]
  %s1 = inlined_call_operand.vmem [shape: f32[3,36,512], index: 1, kind: input, shape index: {}]
  %s2 = inlined_call_operand.vmem [shape: f32[1,256], index: 2, kind: input, shape index: {}]
  %s3 = inlined_call_operand.vmem [shape: f32[3,256,448], index: 3, kind: input, shape index: {}]
  %s4 = inlined_call_operand.vmem [shape: f32[1,192], index: 4, kind: input, shape index: {}]
  %s5 = inlined_call_operand.vmem [shape: f32[192,64], index: 5, kind: input, shape index: {}]
  %s6 = inlined_call_operand.vmem [shape: f32[1,64], index: 6, kind: input, shape index: {}]
  %s7 = inlined_call_operand.vmem [shape: f32[64,5], index: 7, kind: input, shape index: {}]
  %s8 = inlined_call_operand.vmem [shape: f32[1,5], index: 8, kind: input, shape index: {}]
  %s9 = inlined_call_operand.hbm [shape: f32[2,5], index: 9, kind: output, shape index: {}]
  %s10 = sld [smem:[#allocation0]]
  $region46: #{net_forward.1} parent=0
    _
  %s12 = ssub.s32 1, %s10
  %s13 = scalar_select 0, %s12, %s10
  $region1: #{net_forward.1} parent=0
    #allocation2 [shape = 'u8[1024]{0}', space=vmem, size = 0x400, scoped, tag = 'output window, operand 0, single buffered']
    #allocation3 [shape = 's32[1]{0}', space=sflag, size = 0x4, scoped, tag = 'scoped memory for net_forward.1']
    %14 = vsyncpa [#allocation3], 0
    // Predicated region
    $region2: #{net_forward.1} parent=1 // pred_check
      _
    $region3: #{net_forward.1} parent=1 // pred_check_branch
      %16 = sbr.rel (0) target = $region5
    $region4: #{net_forward.1} parent=1 // pred_region
      _
    $region5: #{net_forward.1} parent=1 // pred_fallthru
      _
    // Predicated region
    $region6: #{net_forward.1} parent=1 // pred_check
      _
    $region7: #{net_forward.1} parent=1 // pred_check_branch
      %18 = sbr.rel (0) target = $region9
    $region8: #{net_forward.1} parent=1 // pred_region
      _
    $region9: #{net_forward.1} parent=1 // pred_fallthru
      _
    // Predicated region
    $region10: #{net_forward.1} parent=1 // pred_check
      _
    $region11: #{net_forward.1} parent=1 // pred_check_branch
      %20 = sbr.rel (0) target = $region13
    $region12: #{net_forward.1} parent=1 // pred_region
      _
    $region13: #{net_forward.1} parent=1 // pred_fallthru
      _
    // Predicated region
    $region14: #{net_forward.1} parent=1 // pred_check
      _
    $region15: #{net_forward.1} parent=1 // pred_check_branch
      %22 = sbr.rel (0) target = $region17
    $region16: #{net_forward.1} parent=1 // pred_region
      _
    $region17: #{net_forward.1} parent=1 // pred_fallthru
      _
    // Predicated region
    $region18: #{net_forward.1} parent=1 // pred_check
      _
    $region19: #{net_forward.1} parent=1 // pred_check_branch
      %24 = sbr.rel (0) target = $region21
    $region20: #{net_forward.1} parent=1 // pred_region
      _
    $region21: #{net_forward.1} parent=1 // pred_fallthru
      _
    // Predicated region
    $region22: #{net_forward.1} parent=1 // pred_check
      _
    $region23: #{net_forward.1} parent=1 // pred_check_branch
      %26 = sbr.rel (0) target = $region25
    $region24: #{net_forward.1} parent=1 // pred_region
      _
    $region25: #{net_forward.1} parent=1 // pred_fallthru
      _
    // Predicated region
    $region26: #{net_forward.1} parent=1 // pred_check
      _
    $region27: #{net_forward.1} parent=1 // pred_check_branch
      %28 = sbr.rel (0) target = $region29
    $region28: #{net_forward.1} parent=1 // pred_region
      _
    $region29: #{net_forward.1} parent=1 // pred_fallthru
      _
    // Predicated region
    $region30: #{net_forward.1} parent=1 // pred_check
      _
    $region31: #{net_forward.1} parent=1 // pred_check_branch
      %30 = sbr.rel (0) target = $region33
    $region32: #{net_forward.1} parent=1 // pred_region
      _
    $region33: #{net_forward.1} parent=1 // pred_fallthru
      _
    // Predicated region
    $region34: #{net_forward.1} parent=1 // pred_check
      _
    $region35: #{net_forward.1} parent=1 // pred_check_branch
      %32 = sbr.rel (0) target = $region37
    $region36: #{net_forward.1} parent=1 // pred_region
      _
    $region37: #{net_forward.1} parent=1 // pred_fallthru
      _
    %v33 = vld [vmem:[%s0] sm:$0xff]
    %v34 = vld [vmem:[%s0 + $0x8] sm:$0xff]
    %v35 = vld [vmem:[%s1] sm:$0xff]
    %v36 = vld [vmem:[%s1 + $0x8] sm:$0xff]
    %v37 = vld [vmem:[%s1 + $0x10] sm:$0xff]
    %v38 = vld [vmem:[%s1 + $0x18] sm:$0xff]
    %v39 = vld [vmem:[%s1 + $0x20] sm:$0xff]
    %v40 = vld [vmem:[%s1 + $0x28] sm:$0xff]
    %v41 = vld [vmem:[%s1 + $0x30] sm:$0xff]
    %v42 = vld [vmem:[%s1 + $0x38] sm:$0xff]
    %v43 = vld [vmem:[%s1 + $0x40] sm:$0xff]
    %v44 = vld [vmem:[%s1 + $0x48] sm:$0xff]
    %v45 = vld [vmem:[%s1 + $0x50] sm:$0xff]
    %v46 = vld [vmem:[%s1 + $0x58] sm:$0xff]
    %v47 = vld [vmem:[%s1 + $0x60] sm:$0xff]
    %v48 = vld [vmem:[%s1 + $0x68] sm:$0xff]
    %v49 = vld [vmem:[%s1 + $0x70] sm:$0xff]
    %v50 = vld [vmem:[%s1 + $0x78] sm:$0xff]
    %v51 = vld [vmem:[%s1 + $0x80] sm:$0xf]
    %v52 = vld [vmem:[%s1 + $0x88] sm:$0xf]
    %v53 = vld [vmem:[%s1 + $0x90] sm:$0xf]
    %v54 = vld [vmem:[%s1 + $0x98] sm:$0xf]
    %s55 = scalar_lea.vmem %s0, 16
    %v56 = vld [vmem:[%s55] sm:$0xff]
    %v57 = vld [vmem:[%s55 + $0x8] sm:$0xff]
    %s58 = scalar_lea.vmem %s1, 160
    %v59 = vld [vmem:[%s58] sm:$0xff]
    %v60 = vld [vmem:[%s58 + $0x8] sm:$0xff]
    %v61 = vld [vmem:[%s58 + $0x10] sm:$0xff]
    %v62 = vld [vmem:[%s58 + $0x18] sm:$0xff]
    %v63 = vld [vmem:[%s58 + $0x20] sm:$0xff]
    %v64 = vld [vmem:[%s58 + $0x28] sm:$0xff]
    %v65 = vld [vmem:[%s58 + $0x30] sm:$0xff]
    %v66 = vld [vmem:[%s58 + $0x38] sm:$0xff]
    %v67 = vld [vmem:[%s58 + $0x40] sm:$0xff]
    %v68 = vld [vmem:[%s58 + $0x48] sm:$0xff]
    %v69 = vld [vmem:[%s58 + $0x50] sm:$0xff]
    %v70 = vld [vmem:[%s58 + $0x58] sm:$0xff]
    %v71 = vld [vmem:[%s58 + $0x60] sm:$0xff]
    %v72 = vld [vmem:[%s58 + $0x68] sm:$0xff]
    %v73 = vld [vmem:[%s58 + $0x70] sm:$0xff]
    %v74 = vld [vmem:[%s58 + $0x78] sm:$0xff]
    %v75 = vld [vmem:[%s58 + $0x80] sm:$0xf]
    %v76 = vld [vmem:[%s58 + $0x88] sm:$0xf]
    %v77 = vld [vmem:[%s58 + $0x90] sm:$0xf]
    %v78 = vld [vmem:[%s58 + $0x98] sm:$0xf]
    %vm79 = vcmask 293888
    %v81 = vsel %vm79, %v56, 0
    %v84 = vsel %vm79, %v57, 0
    %vm86 = vcmask 1043456
    %v88 = vsel %vm86, %v75, 0
    %v91 = vsel %vm86, %v76, 0
    %v94 = vsel %vm86, %v77, 0
    %v97 = vsel %vm86, %v78, 0
    %99 = vmatprep.subr.mxu0 %v60
    %100 = vmatpush1.msra.mxu0 %v59
    %101 = vmatprep.subr.mxu0 %v64
    %102 = vmatpush1.msra.mxu0 %v63
    %103 = vmatprep.subr.mxu0 %v68
    %104 = vmatpush1.msra.mxu0 %v67
    %105 = vmatprep.subr.mxu0 %v72
    %106 = vmatpush1.msra.mxu0 %v71
    %107 = vmatprep.subr.mxu0 %v91
    %108 = vmatpush1.msra.mxu0 %v88
    %109 = vmatprep.subr.mxu0 0.0
    %110 = vmatpush1.msra.mxu0 0.0
    %111 = vmatprep.subr.mxu0 0.0
    %112 = vmatpush1.msra.mxu0 0.0
    %113 = vmatprep.subr.mxu0 0.0
    %114 = vmatpush1.msra.mxu0 0.0
    %115 = vmatprep.subr.mxu0 0.0
    %116 = vmatpush1.msra.mxu0 0.0
    %117 = vmatprep.subr.mxu0 0.0
    %118 = vmatpush1.msra.mxu0 0.0
    %119 = vmatprep.subr.mxu0 0.0
    %120 = vmatpush1.msra.mxu0 0.0
    %121 = vmatprep.subr.mxu0 0.0
    %122 = vmatpush1.msra.mxu0 0.0
    %123 = vmatprep.subr.mxu0 0.0
    %124 = vmatpush1.msra.mxu0 0.0
    %125 = vmatprep.subr.mxu0 0.0
    %126 = vmatpush1.msra.mxu0 0.0
    %127 = vmatprep.subr.mxu0 0.0
    %128 = vmatpush1.msra.mxu0 0.0
    %129 = vmatprep.subr.mxu0 0.0
    %130 = vmatpush1.msra.mxu0 0.0
    %131 = vmatprep.subr.mxu0 0.0
    %132 = vmatpush1.msra.mxu0 0.0
    %133 = vmatprep.subr.mxu0 0.0
    %134 = vmatpush1.msra.mxu0 0.0
    %135 = vmatprep.subr.mxu0 0.0
    %136 = vmatpush1.msra.mxu0 0.0
    %137 = vmatprep.subr.mxu0 0.0
    %138 = vmatpush1.msra.mxu0 0.0
    %139 = vmatprep.subr.mxu0 0.0
    %140 = vmatpush1.msra.mxu0 0.0
    %141 = vmatprep.subr.mxu0 0.0
    %142 = vmatpush1.msra.mxu0 0.0
    %143 = vmatprep.subr.mxu0 0.0
    %144 = vmatpush1.msra.mxu0 0.0
    %145 = vmatprep.subr.mxu0 0.0
    %146 = vmatpush1.msra.mxu0 0.0
    %147 = vmatprep.subr.mxu0 0.0
    %148 = vmatpush1.msra.mxu0 0.0
    %149 = vmatprep.subr.mxu0 0.0
    %150 = vmatpush1.msra.mxu0 0.0
    %151 = vmatprep.subr.mxu0 0.0
    %152 = vmatpush1.msra.mxu0 0.0
    %153 = vmatprep.subr.mxu0 0.0
    %154 = vmatpush1.msra.mxu0 0.0
    %155 = vmatprep.subr.mxu0 0.0
    %156 = vmatpush1.msra.mxu0 0.0
    %157 = vmatprep.subr.mxu0 0.0
    %158 = vmatpush1.msra.mxu0 0.0
    %159 = vmatprep.subr.mxu0 0.0
    %160 = vmatpush1.msra.mxu0 0.0
    %161 = vmatprep.subr.mxu0 0.0
    %162 = vmatpush1.msra.mxu0 0.0
    %163 = vmatprep.mubr.f32.mxu0 0.0
    %164 = vmatmul.mubr.f32.gmra.mrb[0].mxu0 %v81
    %v165 = vpop.f32.mrb[0].mxu0
    %v166 = vadd.f32 0.0, %v165
    %v167 = vpop.f32.mrb[0].mxu0
    %v168 = vadd.f32 0.0, %v167
    %169 = vmatprep.mubr.f32.mxu0 0.0
    %170 = vmatmul.mubr.f32.gmra.mrb[0].mxu0 %v84
    %v171 = vpop.f32.mrb[0].mxu0
    %v172 = vadd.f32 0.0, %v171
    %v173 = vpop.f32.mrb[0].mxu0
    %v174 = vadd.f32 0.0, %v173
    %175 = vdwg.mxu0
    %176 = vmatprep.subr.mxu0 %v62
    %177 = vmatpush1.msra.mxu0 %v61
    %178 = vmatprep.subr.mxu0 %v66
    %179 = vmatpush1.msra.mxu0 %v65
    %180 = vmatprep.subr.mxu0 %v70
    %181 = vmatpush1.msra.mxu0 %v69
    %182 = vmatprep.subr.mxu0 %v74
    %183 = vmatpush1.msra.mxu0 %v73
    %184 = vmatprep.subr.mxu0 %v97
    %185 = vmatpush1.msra.mxu0 %v94
    %186 = vmatprep.subr.mxu0 0.0
    %187 = vmatpush1.msra.mxu0 0.0
    %188 = vmatprep.subr.mxu0 0.0
    %189 = vmatpush1.msra.mxu0 0.0
    %190 = vmatprep.subr.mxu0 0.0
    %191 = vmatpush1.msra.mxu0 0.0
    %192 = vmatprep.subr.mxu0 0.0
    %193 = vmatpush1.msra.mxu0 0.0
    %194 = vmatprep.subr.mxu0 0.0
    %195 = vmatpush1.msra.mxu0 0.0
    %196 = vmatprep.subr.mxu0 0.0
    %197 = vmatpush1.msra.mxu0 0.0
    %198 = vmatprep.subr.mxu0 0.0
    %199 = vmatpush1.msra.mxu0 0.0
    %200 = vmatprep.subr.mxu0 0.0
    %201 = vmatpush1.msra.mxu0 0.0
    %202 = vmatprep.subr.mxu0 0.0
    %203 = vmatpush1.msra.mxu0 0.0
    %204 = vmatprep.subr.mxu0 0.0
    %205 = vmatpush1.msra.mxu0 0.0
    %206 = vmatprep.subr.mxu0 0.0
    %207 = vmatpush1.msra.mxu0 0.0
    %208 = vmatprep.subr.mxu0 0.0
    %209 = vmatpush1.msra.mxu0 0.0
    %210 = vmatprep.subr.mxu0 0.0
    %211 = vmatpush1.msra.mxu0 0.0
    %212 = vmatprep.subr.mxu0 0.0
    %213 = vmatpush1.msra.mxu0 0.0
    %214 = vmatprep.subr.mxu0 0.0
    %215 = vmatpush1.msra.mxu0 0.0
    %216 = vmatprep.subr.mxu0 0.0
    %217 = vmatpush1.msra.mxu0 0.0
    %218 = vmatprep.subr.mxu0 0.0
    %219 = vmatpush1.msra.mxu0 0.0
    %220 = vmatprep.subr.mxu0 0.0
    %221 = vmatpush1.msra.mxu0 0.0
    %222 = vmatprep.subr.mxu0 0.0
    %223 = vmatpush1.msra.mxu0 0.0
    %224 = vmatprep.subr.mxu0 0.0
    %225 = vmatpush1.msra.mxu0 0.0
    %226 = vmatprep.subr.mxu0 0.0
    %227 = vmatpush1.msra.mxu0 0.0
    %228 = vmatprep.subr.mxu0 0.0
    %229 = vmatpush1.msra.mxu0 0.0
    %230 = vmatprep.subr.mxu0 0.0
    %231 = vmatpush1.msra.mxu0 0.0
    %232 = vmatprep.subr.mxu0 0.0
    %233 = vmatpush1.msra.mxu0 0.0
    %234 = vmatprep.subr.mxu0 0.0
    %235 = vmatpush1.msra.mxu0 0.0
    %236 = vmatprep.subr.mxu0 0.0
    %237 = vmatpush1.msra.mxu0 0.0
    %238 = vmatprep.subr.mxu0 0.0
    %239 = vmatpush1.msra.mxu0 0.0
    %240 = vmatprep.mubr.f32.mxu0 0.0
    %241 = vmatmul.mubr.f32.gmra.mrb[0].mxu0 %v81
    %v242 = vpop.f32.mrb[0].mxu0
    %v243 = vadd.f32 0.0, %v242
    %v244 = vpop.f32.mrb[0].mxu0
    %v245 = vadd.f32 0.0, %v244
    %246 = vmatprep.mubr.f32.mxu0 0.0
    %247 = vmatmul.mubr.f32.gmra.mrb[0].mxu0 %v84
    %v248 = vpop.f32.mrb[0].mxu0
    %v249 = vadd.f32 0.0, %v248
    %v250 = vpop.f32.mrb[0].mxu0
    %v251 = vadd.f32 0.0, %v250
    %252 = vdwg.mxu0
    %v254 = vsel %vm79, %v33, 0
    %v257 = vsel %vm79, %v34, 0
    %v260 = vsel %vm86, %v51, 0
    %v263 = vsel %vm86, %v52, 0
    %v266 = vsel %vm86, %v53, 0
    %v269 = vsel %vm86, %v54, 0
    %271 = vmatprep.subr.mxu0 %v36
    %272 = vmatpush1.msra.mxu0 %v35
    %273 = vmatprep.subr.mxu0 %v40
    %274 = vmatpush1.msra.mxu0 %v39
    %275 = vmatprep.subr.mxu0 %v44
    %276 = vmatpush1.msra.mxu0 %v43
    %277 = vmatprep.subr.mxu0 %v48
    %278 = vmatpush1.msra.mxu0 %v47
    %279 = vmatprep.subr.mxu0 %v263
    %280 = vmatpush1.msra.mxu0 %v260
    %281 = vmatprep.subr.mxu0 0.0
    %282 = vmatpush1.msra.mxu0 0.0
    %283 = vmatprep.subr.mxu0 0.0
    %284 = vmatpush1.msra.mxu0 0.0
    %285 = vmatprep.subr.mxu0 0.0
    %286 = vmatpush1.msra.mxu0 0.0
    %287 = vmatprep.subr.mxu0 0.0
    %288 = vmatpush1.msra.mxu0 0.0
    %289 = vmatprep.subr.mxu0 0.0
    %290 = vmatpush1.msra.mxu0 0.0
    %291 = vmatprep.subr.mxu0 0.0
    %292 = vmatpush1.msra.mxu0 0.0
    %293 = vmatprep.subr.mxu0 0.0
    %294 = vmatpush1.msra.mxu0 0.0
    %295 = vmatprep.subr.mxu0 0.0
    %296 = vmatpush1.msra.mxu0 0.0
    %297 = vmatprep.subr.mxu0 0.0
    %298 = vmatpush1.msra.mxu0 0.0
    %299 = vmatprep.subr.mxu0 0.0
    %300 = vmatpush1.msra.mxu0 0.0
    %301 = vmatprep.subr.mxu0 0.0
    %302 = vmatpush1.msra.mxu0 0.0
    %303 = vmatprep.subr.mxu0 0.0
    %304 = vmatpush1.msra.mxu0 0.0
    %305 = vmatprep.subr.mxu0 0.0
    %306 = vmatpush1.msra.mxu0 0.0
    %307 = vmatprep.subr.mxu0 0.0
    %308 = vmatpush1.msra.mxu0 0.0
    %309 = vmatprep.subr.mxu0 0.0
    %310 = vmatpush1.msra.mxu0 0.0
    %311 = vmatprep.subr.mxu0 0.0
    %312 = vmatpush1.msra.mxu0 0.0
    %313 = vmatprep.subr.mxu0 0.0
    %314 = vmatpush1.msra.mxu0 0.0
    %315 = vmatprep.subr.mxu0 0.0
    %316 = vmatpush1.msra.mxu0 0.0
    %317 = vmatprep.subr.mxu0 0.0
    %318 = vmatpush1.msra.mxu0 0.0
    %319 = vmatprep.subr.mxu0 0.0
    %320 = vmatpush1.msra.mxu0 0.0
    %321 = vmatprep.subr.mxu0 0.0
    %322 = vmatpush1.msra.mxu0 0.0
    %323 = vmatprep.subr.mxu0 0.0
    %324 = vmatpush1.msra.mxu0 0.0
    %325 = vmatprep.subr.mxu0 0.0
    %326 = vmatpush1.msra.mxu0 0.0
    %327 = vmatprep.subr.mxu0 0.0
    %328 = vmatpush1.msra.mxu0 0.0
    %329 = vmatprep.subr.mxu0 0.0
    %330 = vmatpush1.msra.mxu0 0.0
    %331 = vmatprep.subr.mxu0 0.0
    %332 = vmatpush1.msra.mxu0 0.0
    %333 = vmatprep.subr.mxu0 0.0
    %334 = vmatpush1.msra.mxu0 0.0
    %335 = vmatprep.mubr.f32.mxu0 0.0
    %336 = vmatmul.mubr.f32.gmra.mrb[0].mxu0 %v254
    %v337 = vpop.f32.mrb[0].mxu0
    %v338 = vadd.f32 %v166, %v337
    %v339 = vpop.f32.mrb[0].mxu0
    %v340 = vadd.f32 %v168, %v339
    %341 = vmatprep.mubr.f32.mxu0 0.0
    %342 = vmatmul.mubr.f32.gmra.mrb[0].mxu0 %v257
    %v343 = vpop.f32.mrb[0].mxu0
    %v344 = vadd.f32 %v172, %v343
    %v345 = vpop.f32.mrb[0].mxu0
    %v346 = vadd.f32 %v174, %v345
    %347 = vdwg.mxu0
    %348 = vmatprep.subr.mxu0 %v38
    %349 = vmatpush1.msra.mxu0 %v37
    %350 = vmatprep.subr.mxu0 %v42
    %351 = vmatpush1.msra.mxu0 %v41
    %352 = vmatprep.subr.mxu0 %v46
    %353 = vmatpush1.msra.mxu0 %v45
    %354 = vmatprep.subr.mxu0 %v50
    %355 = vmatpush1.msra.mxu0 %v49
    %356 = vmatprep.subr.mxu0 %v269
    %357 = vmatpush1.msra.mxu0 %v266
    %358 = vmatprep.subr.mxu0 0.0
    %359 = vmatpush1.msra.mxu0 0.0
    %360 = vmatprep.subr.mxu0 0.0
    %361 = vmatpush1.msra.mxu0 0.0
    %362 = vmatprep.subr.mxu0 0.0
    %363 = vmatpush1.msra.mxu0 0.0
    %364 = vmatprep.subr.mxu0 0.0
    %365 = vmatpush1.msra.mxu0 0.0
    %366 = vmatprep.subr.mxu0 0.0
    %367 = vmatpush1.msra.mxu0 0.0
    %368 = vmatprep.subr.mxu0 0.0
    %369 = vmatpush1.msra.mxu0 0.0
    %370 = vmatprep.subr.mxu0 0.0
    %371 = vmatpush1.msra.mxu0 0.0
    %372 = vmatprep.subr.mxu0 0.0
    %373 = vmatpush1.msra.mxu0 0.0
    %374 = vmatprep.subr.mxu0 0.0
    %375 = vmatpush1.msra.mxu0 0.0
    %376 = vmatprep.subr.mxu0 0.0
    %377 = vmatpush1.msra.mxu0 0.0
    %378 = vmatprep.subr.mxu0 0.0
    %379 = vmatpush1.msra.mxu0 0.0
    %380 = vmatprep.subr.mxu0 0.0
    %381 = vmatpush1.msra.mxu0 0.0
    %382 = vmatprep.subr.mxu0 0.0
    %383 = vmatpush1.msra.mxu0 0.0
    %384 = vmatprep.subr.mxu0 0.0
    %385 = vmatpush1.msra.mxu0 0.0
    %386 = vmatprep.subr.mxu0 0.0
    %387 = vmatpush1.msra.mxu0 0.0
    %388 = vmatprep.subr.mxu0 0.0
    %389 = vmatpush1.msra.mxu0 0.0
    %390 = vmatprep.subr.mxu0 0.0
    %391 = vmatpush1.msra.mxu0 0.0
    %392 = vmatprep.subr.mxu0 0.0
    %393 = vmatpush1.msra.mxu0 0.0
    %394 = vmatprep.subr.mxu0 0.0
    %395 = vmatpush1.msra.mxu0 0.0
    %396 = vmatprep.subr.mxu0 0.0
    %397 = vmatpush1.msra.mxu0 0.0
    %398 = vmatprep.subr.mxu0 0.0
    %399 = vmatpush1.msra.mxu0 0.0
    %400 = vmatprep.subr.mxu0 0.0
    %401 = vmatpush1.msra.mxu0 0.0
    %402 = vmatprep.subr.mxu0 0.0
    %403 = vmatpush1.msra.mxu0 0.0
    %404 = vmatprep.subr.mxu0 0.0
    %405 = vmatpush1.msra.mxu0 0.0
    %406 = vmatprep.subr.mxu0 0.0
    %407 = vmatpush1.msra.mxu0 0.0
    %408 = vmatprep.subr.mxu0 0.0
    %409 = vmatpush1.msra.mxu0 0.0
    %410 = vmatprep.subr.mxu0 0.0
    %411 = vmatpush1.msra.mxu0 0.0
    %412 = vmatprep.mubr.f32.mxu0 0.0
    %413 = vmatmul.mubr.f32.gmra.mrb[0].mxu0 %v254
    %v414 = vpop.f32.mrb[0].mxu0
    %v415 = vadd.f32 %v243, %v414
    %v416 = vpop.f32.mrb[0].mxu0
    %v417 = vadd.f32 %v245, %v416
    %418 = vmatprep.mubr.f32.mxu0 0.0
    %419 = vmatmul.mubr.f32.gmra.mrb[0].mxu0 %v257
    %v420 = vpop.f32.mrb[0].mxu0
    %v421 = vadd.f32 %v249, %v420
    %v422 = vpop.f32.mrb[0].mxu0
    %v423 = vadd.f32 %v251, %v422
    %424 = vdwg.mxu0
    %s425 = scalar_lea.vmem %s0, 32
    %v426 = vld [vmem:[%s425] sm:$0xff]
    %v427 = vld [vmem:[%s425 + $0x8] sm:$0xff]
    %s428 = scalar_lea.vmem %s1, 320
    %v429 = vld [vmem:[%s428] sm:$0xff]
    %v430 = vld [vmem:[%s428 + $0x8] sm:$0xff]
    %v431 = vld [vmem:[%s428 + $0x10] sm:$0xff]
    %v432 = vld [vmem:[%s428 + $0x18] sm:$0xff]
    %v433 = vld [vmem:[%s428 + $0x20] sm:$0xff]
    %v434 = vld [vmem:[%s428 + $0x28] sm:$0xff]
    %v435 = vld [vmem:[%s428 + $0x30] sm:$0xff]
    %v436 = vld [vmem:[%s428 + $0x38] sm:$0xff]
    %v437 = vld [vmem:[%s428 + $0x40] sm:$0xff]
    %v438 = vld [vmem:[%s428 + $0x48] sm:$0xff]
    %v439 = vld [vmem:[%s428 + $0x50] sm:$0xff]
    %v440 = vld [vmem:[%s428 + $0x58] sm:$0xff]
    %v441 = vld [vmem:[%s428 + $0x60] sm:$0xff]
    %v442 = vld [vmem:[%s428 + $0x68] sm:$0xff]
    %v443 = vld [vmem:[%s428 + $0x70] sm:$0xff]
    %v444 = vld [vmem:[%s428 + $0x78] sm:$0xff]
    %v445 = vld [vmem:[%s428 + $0x80] sm:$0xf]
    %v446 = vld [vmem:[%s428 + $0x88] sm:$0xf]
    %v447 = vld [vmem:[%s428 + $0x90] sm:$0xf]
    %v448 = vld [vmem:[%s428 + $0x98] sm:$0xf]
    %v450 = vsel %vm79, %v426, 0
    %v453 = vsel %vm79, %v427, 0
    %v456 = vsel %vm86, %v445, 0
    %v459 = vsel %vm86, %v446, 0
    %v462 = vsel %vm86, %v447, 0
    %v465 = vsel %vm86, %v448, 0
    %467 = vmatprep.subr.mxu0 %v430
    %468 = vmatpush1.msra.mxu0 %v429
    %469 = vmatprep.subr.mxu0 %v434
    %470 = vmatpush1.msra.mxu0 %v433
    %471 = vmatprep.subr.mxu0 %v438
    %472 = vmatpush1.msra.mxu0 %v437
    %473 = vmatprep.subr.mxu0 %v442
    %474 = vmatpush1.msra.mxu0 %v441
    %475 = vmatprep.subr.mxu0 %v459
    %476 = vmatpush1.msra.mxu0 %v456
    %477 = vmatprep.subr.mxu0 0.0
    %478 = vmatpush1.msra.mxu0 0.0
    %479 = vmatprep.subr.mxu0 0.0
    %480 = vmatpush1.msra.mxu0 0.0
    %481 = vmatprep.subr.mxu0 0.0
    %482 = vmatpush1.msra.mxu0 0.0
    %483 = vmatprep.subr.mxu0 0.0
    %484 = vmatpush1.msra.mxu0 0.0
    %485 = vmatprep.subr.mxu0 0.0
    %486 = vmatpush1.msra.mxu0 0.0
    %487 = vmatprep.subr.mxu0 0.0
    %488 = vmatpush1.msra.mxu0 0.0
    %489 = vmatprep.subr.mxu0 0.0
    %490 = vmatpush1.msra.mxu0 0.0
    %491 = vmatprep.subr.mxu0 0.0
    %492 = vmatpush1.msra.mxu0 0.0
    %493 = vmatprep.subr.mxu0 0.0
    %494 = vmatpush1.msra.mxu0 0.0
    %495 = vmatprep.subr.mxu0 0.0
    %496 = vmatpush1.msra.mxu0 0.0
    %497 = vmatprep.subr.mxu0 0.0
    %498 = vmatpush1.msra.mxu0 0.0
    %499 = vmatprep.subr.mxu0 0.0
    %500 = vmatpush1.msra.mxu0 0.0
    %501 = vmatprep.subr.mxu0 0.0
    %502 = vmatpush1.msra.mxu0 0.0
    %503 = vmatprep.subr.mxu0 0.0
    %504 = vmatpush1.msra.mxu0 0.0
    %505 = vmatprep.subr.mxu0 0.0
    %506 = vmatpush1.msra.mxu0 0.0
    %507 = vmatprep.subr.mxu0 0.0
    %508 = vmatpush1.msra.mxu0 0.0
    %509 = vmatprep.subr.mxu0 0.0
    %510 = vmatpush1.msra.mxu0 0.0
    %511 = vmatprep.subr.mxu0 0.0
    %512 = vmatpush1.msra.mxu0 0.0
    %513 = vmatprep.subr.mxu0 0.0
    %514 = vmatpush1.msra.mxu0 0.0
    %515 = vmatprep.subr.mxu0 0.0
    %516 = vmatpush1.msra.mxu0 0.0
    %517 = vmatprep.subr.mxu0 0.0
    %518 = vmatpush1.msra.mxu0 0.0
    %519 = vmatprep.subr.mxu0 0.0
    %520 = vmatpush1.msra.mxu0 0.0
    %521 = vmatprep.subr.mxu0 0.0
    %522 = vmatpush1.msra.mxu0 0.0
    %523 = vmatprep.subr.mxu0 0.0
    %524 = vmatpush1.msra.mxu0 0.0
    %525 = vmatprep.subr.mxu0 0.0
    %526 = vmatpush1.msra.mxu0 0.0
    %527 = vmatprep.subr.mxu0 0.0
    %528 = vmatpush1.msra.mxu0 0.0
    %529 = vmatprep.subr.mxu0 0.0
    %530 = vmatpush1.msra.mxu0 0.0
    %531 = vmatprep.mubr.f32.mxu0 0.0
    %532 = vmatmul.mubr.f32.gmra.mrb[0].mxu0 %v450
    %v533 = vpop.f32.mrb[0].mxu0
    %v534 = vadd.f32 0.0, %v533
    %v535 = vpop.f32.mrb[0].mxu0
    %v536 = vadd.f32 0.0, %v535
    %537 = vmatprep.mubr.f32.mxu0 0.0
    %538 = vmatmul.mubr.f32.gmra.mrb[0].mxu0 %v453
    %v539 = vpop.f32.mrb[0].mxu0
    %v540 = vadd.f32 0.0, %v539
    %v541 = vpop.f32.mrb[0].mxu0
    %v542 = vadd.f32 0.0, %v541
    %543 = vdwg.mxu0
    %544 = vmatprep.subr.mxu0 %v432
    %545 = vmatpush1.msra.mxu0 %v431
    %546 = vmatprep.subr.mxu0 %v436
    %547 = vmatpush1.msra.mxu0 %v435
    %548 = vmatprep.subr.mxu0 %v440
    %549 = vmatpush1.msra.mxu0 %v439
    %550 = vmatprep.subr.mxu0 %v444
    %551 = vmatpush1.msra.mxu0 %v443
    %552 = vmatprep.subr.mxu0 %v465
    %553 = vmatpush1.msra.mxu0 %v462
    %554 = vmatprep.subr.mxu0 0.0
    %555 = vmatpush1.msra.mxu0 0.0
    %556 = vmatprep.subr.mxu0 0.0
    %557 = vmatpush1.msra.mxu0 0.0
    %558 = vmatprep.subr.mxu0 0.0
    %559 = vmatpush1.msra.mxu0 0.0
    %560 = vmatprep.subr.mxu0 0.0
    %561 = vmatpush1.msra.mxu0 0.0
    %562 = vmatprep.subr.mxu0 0.0
    %563 = vmatpush1.msra.mxu0 0.0
    %564 = vmatprep.subr.mxu0 0.0
    %565 = vmatpush1.msra.mxu0 0.0
    %566 = vmatprep.subr.mxu0 0.0
    %567 = vmatpush1.msra.mxu0 0.0
    %568 = vmatprep.subr.mxu0 0.0
    %569 = vmatpush1.msra.mxu0 0.0
    %570 = vmatprep.subr.mxu0 0.0
    %571 = vmatpush1.msra.mxu0 0.0
    %572 = vmatprep.subr.mxu0 0.0
    %573 = vmatpush1.msra.mxu0 0.0
    %574 = vmatprep.subr.mxu0 0.0
    %575 = vmatpush1.msra.mxu0 0.0
    %576 = vmatprep.subr.mxu0 0.0
    %577 = vmatpush1.msra.mxu0 0.0
    %578 = vmatprep.subr.mxu0 0.0
    %579 = vmatpush1.msra.mxu0 0.0
    %580 = vmatprep.subr.mxu0 0.0
    %581 = vmatpush1.msra.mxu0 0.0
    %582 = vmatprep.subr.mxu0 0.0
    %583 = vmatpush1.msra.mxu0 0.0
    %584 = vmatprep.subr.mxu0 0.0
    %585 = vmatpush1.msra.mxu0 0.0
    %586 = vmatprep.subr.mxu0 0.0
    %587 = vmatpush1.msra.mxu0 0.0
    %588 = vmatprep.subr.mxu0 0.0
    %589 = vmatpush1.msra.mxu0 0.0
    %590 = vmatprep.subr.mxu0 0.0
    %591 = vmatpush1.msra.mxu0 0.0
    %592 = vmatprep.subr.mxu0 0.0
    %593 = vmatpush1.msra.mxu0 0.0
    %594 = vmatprep.subr.mxu0 0.0
    %595 = vmatpush1.msra.mxu0 0.0
    %596 = vmatprep.subr.mxu0 0.0
    %597 = vmatpush1.msra.mxu0 0.0
    %598 = vmatprep.subr.mxu0 0.0
    %599 = vmatpush1.msra.mxu0 0.0
    %600 = vmatprep.subr.mxu0 0.0
    %601 = vmatpush1.msra.mxu0 0.0
    %602 = vmatprep.subr.mxu0 0.0
    %603 = vmatpush1.msra.mxu0 0.0
    %604 = vmatprep.subr.mxu0 0.0
    %605 = vmatpush1.msra.mxu0 0.0
    %606 = vmatprep.subr.mxu0 0.0
    %607 = vmatpush1.msra.mxu0 0.0
    %608 = vmatprep.mubr.f32.mxu0 0.0
    %609 = vmatmul.mubr.f32.gmra.mrb[0].mxu0 %v450
    %v610 = vpop.f32.mrb[0].mxu0
    %v611 = vadd.f32 0.0, %v610
    %v612 = vpop.f32.mrb[0].mxu0
    %v613 = vadd.f32 0.0, %v612
    %614 = vmatprep.mubr.f32.mxu0 0.0
    %615 = vmatmul.mubr.f32.gmra.mrb[0].mxu0 %v453
    %v616 = vpop.f32.mrb[0].mxu0
    %v617 = vadd.f32 0.0, %v616
    %v618 = vpop.f32.mrb[0].mxu0
    %v619 = vadd.f32 0.0, %v618
    %620 = vdwg.mxu0
    %v621 = vadd.f32 %v338, %v534
    %v622 = vadd.f32 %v340, %v536
    %v623 = vadd.f32 %v415, %v611
    %v624 = vadd.f32 %v417, %v613
    %v625 = vadd.f32 %v344, %v540
    %v626 = vadd.f32 %v346, %v542
    %v627 = vadd.f32 %v421, %v617
    %v628 = vadd.f32 %v423, %v619
    %v629 = vmax.f32 %v621, %v625
    %v630 = vmax.f32 %v622, %v626
    %v631 = vmax.f32 %v623, %v627
    %v632 = vmax.f32 %v624, %v628
    %v633 = vmax.f32 %v629, %v631
    %v634 = vmax.f32 %v630, %v632
    %v635 = vld [vmem:[%s2] sm:$0x3]
    %v637 = vlaneseq
    %v638 = vshrl.u32 %v637, 7
    %v639 = vsub.s32 0, %v638
    %v640 = vrot.slane %v635, %v639
    %v641 = vlaneseq
    %v642 = vshrl.u32 %v641, 7
    %v643 = vsub.s32 1, %v642
    %v644 = vrot.slane %v635, %v643
    %v647 = vadd.f32 %v633, %v640
    %v648 = vadd.f32 %v634, %v644
    %vm649 = vcmp.gt.f32.partialorder %v647, 0.0
    %vm650 = vcmp.gt.f32.partialorder %v648, 0.0
    %v651 = vmul.f32 %v647, 0.1
    %v652 = vmul.f32 %v648, 0.1
    %v653 = vsel %vm649, %v647, %v651
    %v654 = vsel %vm650, %v648, %v652
    %v655 = vld [vmem:[%s3] sm:$0xff]
    %v656 = vld [vmem:[%s3 + $0x8] sm:$0xff]
    %v657 = vld [vmem:[%s3 + $0x10] sm:$0xff]
    %v658 = vld [vmem:[%s3 + $0x18] sm:$0xff]
    %v659 = vld [vmem:[%s3 + $0x20] sm:$0xff]
    %v660 = vld [vmem:[%s3 + $0x28] sm:$0xff]
    %v661 = vld [vmem:[%s3 + $0x30] sm:$0xff]
    %v662 = vld [vmem:[%s3 + $0x38] sm:$0xff]
    %v663 = vld [vmem:[%s3 + $0x40] sm:$0xff]
    %v664 = vld [vmem:[%s3 + $0x48] sm:$0xff]
    %v665 = vld [vmem:[%s3 + $0x50] sm:$0xff]
    %v666 = vld [vmem:[%s3 + $0x58] sm:$0xff]
    %v667 = vld [vmem:[%s3 + $0x60] sm:$0xff]
    %v668 = vld [vmem:[%s3 + $0x68] sm:$0xff]
    %v669 = vld [vmem:[%s3 + $0x70] sm:$0xff]
    %v670 = vld [vmem:[%s3 + $0x78] sm:$0xff]
    %v671 = vld [vmem:[%s3 + $0x80] sm:$0xff]
    %v672 = vld [vmem:[%s3 + $0x88] sm:$0xff]
    %v673 = vld [vmem:[%s3 + $0x90] sm:$0xff]
    %v674 = vld [vmem:[%s3 + $0x98] sm:$0xff]
    %v675 = vld [vmem:[%s3 + $0xa0] sm:$0xff]
    %v676 = vld [vmem:[%s3 + $0xa8] sm:$0xff]
    %v677 = vld [vmem:[%s3 + $0xb0] sm:$0xff]
    %v678 = vld [vmem:[%s3 + $0xb8] sm:$0xff]
    %v679 = vld [vmem:[%s3 + $0xc0] sm:$0xff]
    %v680 = vld [vmem:[%s3 + $0xc8] sm:$0xff]
    %v681 = vld [vmem:[%s3 + $0xd0] sm:$0xff]
    %v682 = vld [vmem:[%s3 + $0xd8] sm:$0xff]
    %v683 = vld [vmem:[%s3 + $0xe0] sm:$0xff]
    %v684 = vld [vmem:[%s3 + $0xe8] sm:$0xff]
    %v685 = vld [vmem:[%s3 + $0xf0] sm:$0xff]
    %v686 = vld [vmem:[%s3 + $0xf8] sm:$0xff]
    %v687 = vld [vmem:[%s3 + $0x100] sm:$0xff]
    %v688 = vld [vmem:[%s3 + $0x108] sm:$0xff]
    %v689 = vld [vmem:[%s3 + $0x110] sm:$0xff]
    %v690 = vld [vmem:[%s3 + $0x118] sm:$0xff]
    %v691 = vld [vmem:[%s3 + $0x120] sm:$0xff]
    %v692 = vld [vmem:[%s3 + $0x128] sm:$0xff]
    %v693 = vld [vmem:[%s3 + $0x130] sm:$0xff]
    %v694 = vld [vmem:[%s3 + $0x138] sm:$0xff]
    %v695 = vld [vmem:[%s3 + $0x140] sm:$0xff]
    %v696 = vld [vmem:[%s3 + $0x148] sm:$0xff]
    %v697 = vld [vmem:[%s3 + $0x150] sm:$0xff]
    %v698 = vld [vmem:[%s3 + $0x158] sm:$0xff]
    %v699 = vld [vmem:[%s3 + $0x160] sm:$0xff]
    %v700 = vld [vmem:[%s3 + $0x168] sm:$0xff]
    %v701 = vld [vmem:[%s3 + $0x170] sm:$0xff]
    %v702 = vld [vmem:[%s3 + $0x178] sm:$0xff]
    %v703 = vld [vmem:[%s3 + $0x180] sm:$0xff]
    %v704 = vld [vmem:[%s3 + $0x188] sm:$0xff]
    %v705 = vld [vmem:[%s3 + $0x190] sm:$0xff]
    %v706 = vld [vmem:[%s3 + $0x198] sm:$0xff]
    %v707 = vld [vmem:[%s3 + $0x1a0] sm:$0xff]
    %v708 = vld [vmem:[%s3 + $0x1a8] sm:$0xff]
    %v709 = vld [vmem:[%s3 + $0x1b0] sm:$0xff]
    %v710 = vld [vmem:[%s3 + $0x1b8] sm:$0xff]
    %v711 = vld [vmem:[%s3 + $0x1c0] sm:$0xff]
    %v712 = vld [vmem:[%s3 + $0x1c8] sm:$0xff]
    %v713 = vld [vmem:[%s3 + $0x1d0] sm:$0xff]
    %v714 = vld [vmem:[%s3 + $0x1d8] sm:$0xff]
    %v715 = vld [vmem:[%s3 + $0x1e0] sm:$0xff]
    %v716 = vld [vmem:[%s3 + $0x1e8] sm:$0xff]
    %v717 = vld [vmem:[%s3 + $0x1f0] sm:$0xff]
    %v718 = vld [vmem:[%s3 + $0x1f8] sm:$0xff]
    %v719 = vld [vmem:[%s3 + $0x200] sm:$0xff]
    %v720 = vld [vmem:[%s3 + $0x208] sm:$0xff]
    %v721 = vld [vmem:[%s3 + $0x210] sm:$0xff]
    %v722 = vld [vmem:[%s3 + $0x218] sm:$0xff]
    %v723 = vld [vmem:[%s3 + $0x220] sm:$0xff]
    %v724 = vld [vmem:[%s3 + $0x228] sm:$0xff]
    %v725 = vld [vmem:[%s3 + $0x230] sm:$0xff]
    %v726 = vld [vmem:[%s3 + $0x238] sm:$0xff]
    %v727 = vld [vmem:[%s3 + $0x240] sm:$0xff]
    %v728 = vld [vmem:[%s3 + $0x248] sm:$0xff]
    %v729 = vld [vmem:[%s3 + $0x250] sm:$0xff]
    %v730 = vld [vmem:[%s3 + $0x258] sm:$0xff]
    %v731 = vld [vmem:[%s3 + $0x260] sm:$0xff]
    %v732 = vld [vmem:[%s3 + $0x268] sm:$0xff]
    %v733 = vld [vmem:[%s3 + $0x270] sm:$0xff]
    %v734 = vld [vmem:[%s3 + $0x278] sm:$0xff]
    %v735 = vld [vmem:[%s3 + $0x280] sm:$0xff]
    %v736 = vld [vmem:[%s3 + $0x288] sm:$0xff]
    %v737 = vld [vmem:[%s3 + $0x290] sm:$0xff]
    %v738 = vld [vmem:[%s3 + $0x298] sm:$0xff]
    %v739 = vld [vmem:[%s3 + $0x2a0] sm:$0xff]
    %v740 = vld [vmem:[%s3 + $0x2a8] sm:$0xff]
    %v741 = vld [vmem:[%s3 + $0x2b0] sm:$0xff]
    %v742 = vld [vmem:[%s3 + $0x2b8] sm:$0xff]
    %v743 = vld [vmem:[%s3 + $0x2c0] sm:$0xff]
    %v744 = vld [vmem:[%s3 + $0x2c8] sm:$0xff]
    %v745 = vld [vmem:[%s3 + $0x2d0] sm:$0xff]
    %v746 = vld [vmem:[%s3 + $0x2d8] sm:$0xff]
    %v747 = vld [vmem:[%s3 + $0x2e0] sm:$0xff]
    %v748 = vld [vmem:[%s3 + $0x2e8] sm:$0xff]
    %v749 = vld [vmem:[%s3 + $0x2f0] sm:$0xff]
    %v750 = vld [vmem:[%s3 + $0x2f8] sm:$0xff]
    %v751 = vld [vmem:[%s3 + $0x300] sm:$0xff]
    %v752 = vld [vmem:[%s3 + $0x308] sm:$0xff]
    %v753 = vld [vmem:[%s3 + $0x310] sm:$0xff]
    %v754 = vld [vmem:[%s3 + $0x318] sm:$0xff]
    %v755 = vld [vmem:[%s3 + $0x320] sm:$0xff]
    %v756 = vld [vmem:[%s3 + $0x328] sm:$0xff]
    %v757 = vld [vmem:[%s3 + $0x330] sm:$0xff]
    %v758 = vld [vmem:[%s3 + $0x338] sm:$0xff]
    %v759 = vld [vmem:[%s3 + $0x340] sm:$0xff]
    %v760 = vld [vmem:[%s3 + $0x348] sm:$0xff]
    %v761 = vld [vmem:[%s3 + $0x350] sm:$0xff]
    %v762 = vld [vmem:[%s3 + $0x358] sm:$0xff]
    %v763 = vld [vmem:[%s3 + $0x360] sm:$0xff]
    %v764 = vld [vmem:[%s3 + $0x368] sm:$0xff]
    %v765 = vld [vmem:[%s3 + $0x370] sm:$0xff]
    %v766 = vld [vmem:[%s3 + $0x378] sm:$0xff]
    %v767 = vld [vmem:[%s3 + $0x380] sm:$0xff]
    %v768 = vld [vmem:[%s3 + $0x388] sm:$0xff]
    %v769 = vld [vmem:[%s3 + $0x390] sm:$0xff]
    %v770 = vld [vmem:[%s3 + $0x398] sm:$0xff]
    %v771 = vld [vmem:[%s3 + $0x3a0] sm:$0xff]
    %v772 = vld [vmem:[%s3 + $0x3a8] sm:$0xff]
    %v773 = vld [vmem:[%s3 + $0x3b0] sm:$0xff]
    %v774 = vld [vmem:[%s3 + $0x3b8] sm:$0xff]
    %v775 = vld [vmem:[%s3 + $0x3c0] sm:$0xff]
    %v776 = vld [vmem:[%s3 + $0x3c8] sm:$0xff]
    %v777 = vld [vmem:[%s3 + $0x3d0] sm:$0xff]
    %v778 = vld [vmem:[%s3 + $0x3d8] sm:$0xff]
    %v779 = vld [vmem:[%s3 + $0x3e0] sm:$0xff]
    %v780 = vld [vmem:[%s3 + $0x3e8] sm:$0xff]
    %v781 = vld [vmem:[%s3 + $0x3f0] sm:$0xff]
    %v782 = vld [vmem:[%s3 + $0x3f8] sm:$0xff]
    %s783 = scalar_lea.vmem %s3, 1024
    %v784 = vld [vmem:[%s783] sm:$0xff]
    %v785 = vld [vmem:[%s783 + $0x8] sm:$0xff]
    %v786 = vld [vmem:[%s783 + $0x10] sm:$0xff]
    %v787 = vld [vmem:[%s783 + $0x18] sm:$0xff]
    %v788 = vld [vmem:[%s783 + $0x20] sm:$0xff]
    %v789 = vld [vmem:[%s783 + $0x28] sm:$0xff]
    %v790 = vld [vmem:[%s783 + $0x30] sm:$0xff]
    %v791 = vld [vmem:[%s783 + $0x38] sm:$0xff]
    %v792 = vld [vmem:[%s783 + $0x40] sm:$0xff]
    %v793 = vld [vmem:[%s783 + $0x48] sm:$0xff]
    %v794 = vld [vmem:[%s783 + $0x50] sm:$0xff]
    %v795 = vld [vmem:[%s783 + $0x58] sm:$0xff]
    %v796 = vld [vmem:[%s783 + $0x60] sm:$0xff]
    %v797 = vld [vmem:[%s783 + $0x68] sm:$0xff]
    %v798 = vld [vmem:[%s783 + $0x70] sm:$0xff]
    %v799 = vld [vmem:[%s783 + $0x78] sm:$0xff]
    %v800 = vld [vmem:[%s783 + $0x80] sm:$0xff]
    %v801 = vld [vmem:[%s783 + $0x88] sm:$0xff]
    %v802 = vld [vmem:[%s783 + $0x90] sm:$0xff]
    %v803 = vld [vmem:[%s783 + $0x98] sm:$0xff]
    %v804 = vld [vmem:[%s783 + $0xa0] sm:$0xff]
    %v805 = vld [vmem:[%s783 + $0xa8] sm:$0xff]
    %v806 = vld [vmem:[%s783 + $0xb0] sm:$0xff]
    %v807 = vld [vmem:[%s783 + $0xb8] sm:$0xff]
    %v808 = vld [vmem:[%s783 + $0xc0] sm:$0xff]
    %v809 = vld [vmem:[%s783 + $0xc8] sm:$0xff]
    %v810 = vld [vmem:[%s783 + $0xd0] sm:$0xff]
    %v811 = vld [vmem:[%s783 + $0xd8] sm:$0xff]
    %v812 = vld [vmem:[%s783 + $0xe0] sm:$0xff]
    %v813 = vld [vmem:[%s783 + $0xe8] sm:$0xff]
    %v814 = vld [vmem:[%s783 + $0xf0] sm:$0xff]
    %v815 = vld [vmem:[%s783 + $0xf8] sm:$0xff]
    %v816 = vld [vmem:[%s783 + $0x100] sm:$0xff]
    %v817 = vld [vmem:[%s783 + $0x108] sm:$0xff]
    %v818 = vld [vmem:[%s783 + $0x110] sm:$0xff]
    %v819 = vld [vmem:[%s783 + $0x118] sm:$0xff]
    %v820 = vld [vmem:[%s783 + $0x120] sm:$0xff]
    %v821 = vld [vmem:[%s783 + $0x128] sm:$0xff]
    %v822 = vld [vmem:[%s783 + $0x130] sm:$0xff]
    %v823 = vld [vmem:[%s783 + $0x138] sm:$0xff]
    %v824 = vld [vmem:[%s783 + $0x140] sm:$0xff]
    %v825 = vld [vmem:[%s783 + $0x148] sm:$0xff]
    %v826 = vld [vmem:[%s783 + $0x150] sm:$0xff]
    %v827 = vld [vmem:[%s783 + $0x158] sm:$0xff]
    %v828 = vld [vmem:[%s783 + $0x160] sm:$0xff]
    %v829 = vld [vmem:[%s783 + $0x168] sm:$0xff]
    %v830 = vld [vmem:[%s783 + $0x170] sm:$0xff]
    %v831 = vld [vmem:[%s783 + $0x178] sm:$0xff]
    %v832 = vld [vmem:[%s783 + $0x180] sm:$0xff]
    %v833 = vld [vmem:[%s783 + $0x188] sm:$0xff]
    %v834 = vld [vmem:[%s783 + $0x190] sm:$0xff]
    %v835 = vld [vmem:[%s783 + $0x198] sm:$0xff]
    %v836 = vld [vmem:[%s783 + $0x1a0] sm:$0xff]
    %v837 = vld [vmem:[%s783 + $0x1a8] sm:$0xff]
    %v838 = vld [vmem:[%s783 + $0x1b0] sm:$0xff]
    %v839 = vld [vmem:[%s783 + $0x1b8] sm:$0xff]
    %v840 = vld [vmem:[%s783 + $0x1c0] sm:$0xff]
    %v841 = vld [vmem:[%s783 + $0x1c8] sm:$0xff]
    %v842 = vld [vmem:[%s783 + $0x1d0] sm:$0xff]
    %v843 = vld [vmem:[%s783 + $0x1d8] sm:$0xff]
    %v844 = vld [vmem:[%s783 + $0x1e0] sm:$0xff]
    %v845 = vld [vmem:[%s783 + $0x1e8] sm:$0xff]
    %v846 = vld [vmem:[%s783 + $0x1f0] sm:$0xff]
    %v847 = vld [vmem:[%s783 + $0x1f8] sm:$0xff]
    %v848 = vld [vmem:[%s783 + $0x200] sm:$0xff]
    %v849 = vld [vmem:[%s783 + $0x208] sm:$0xff]
    %v850 = vld [vmem:[%s783 + $0x210] sm:$0xff]
    %v851 = vld [vmem:[%s783 + $0x218] sm:$0xff]
    %v852 = vld [vmem:[%s783 + $0x220] sm:$0xff]
    %v853 = vld [vmem:[%s783 + $0x228] sm:$0xff]
    %v854 = vld [vmem:[%s783 + $0x230] sm:$0xff]
    %v855 = vld [vmem:[%s783 + $0x238] sm:$0xff]
    %v856 = vld [vmem:[%s783 + $0x240] sm:$0xff]
    %v857 = vld [vmem:[%s783 + $0x248] sm:$0xff]
    %v858 = vld [vmem:[%s783 + $0x250] sm:$0xff]
    %v859 = vld [vmem:[%s783 + $0x258] sm:$0xff]
    %v860 = vld [vmem:[%s783 + $0x260] sm:$0xff]
    %v861 = vld [vmem:[%s783 + $0x268] sm:$0xff]
    %v862 = vld [vmem:[%s783 + $0x270] sm:$0xff]
    %v863 = vld [vmem:[%s783 + $0x278] sm:$0xff]
    %v864 = vld [vmem:[%s783 + $0x280] sm:$0xff]
    %v865 = vld [vmem:[%s783 + $0x288] sm:$0xff]
    %v866 = vld [vmem:[%s783 + $0x290] sm:$0xff]
    %v867 = vld [vmem:[%s783 + $0x298] sm:$0xff]
    %v868 = vld [vmem:[%s783 + $0x2a0] sm:$0xff]
    %v869 = vld [vmem:[%s783 + $0x2a8] sm:$0xff]
    %v870 = vld [vmem:[%s783 + $0x2b0] sm:$0xff]
    %v871 = vld [vmem:[%s783 + $0x2b8] sm:$0xff]
    %v872 = vld [vmem:[%s783 + $0x2c0] sm:$0xff]
    %v873 = vld [vmem:[%s783 + $0x2c8] sm:$0xff]
    %v874 = vld [vmem:[%s783 + $0x2d0] sm:$0xff]
    %v875 = vld [vmem:[%s783 + $0x2d8] sm:$0xff]
    %v876 = vld [vmem:[%s783 + $0x2e0] sm:$0xff]
    %v877 = vld [vmem:[%s783 + $0x2e8] sm:$0xff]
    %v878 = vld [vmem:[%s783 + $0x2f0] sm:$0xff]
    %v879 = vld [vmem:[%s783 + $0x2f8] sm:$0xff]
    %v880 = vld [vmem:[%s783 + $0x300] sm:$0xff]
    %v881 = vld [vmem:[%s783 + $0x308] sm:$0xff]
    %v882 = vld [vmem:[%s783 + $0x310] sm:$0xff]
    %v883 = vld [vmem:[%s783 + $0x318] sm:$0xff]
    %v884 = vld [vmem:[%s783 + $0x320] sm:$0xff]
    %v885 = vld [vmem:[%s783 + $0x328] sm:$0xff]
    %v886 = vld [vmem:[%s783 + $0x330] sm:$0xff]
    %v887 = vld [vmem:[%s783 + $0x338] sm:$0xff]
    %v888 = vld [vmem:[%s783 + $0x340] sm:$0xff]
    %v889 = vld [vmem:[%s783 + $0x348] sm:$0xff]
    %v890 = vld [vmem:[%s783 + $0x350] sm:$0xff]
    %v891 = vld [vmem:[%s783 + $0x358] sm:$0xff]
    %v892 = vld [vmem:[%s783 + $0x360] sm:$0xff]
    %v893 = vld [vmem:[%s783 + $0x368] sm:$0xff]
    %v894 = vld [vmem:[%s783 + $0x370] sm:$0xff]
    %v895 = vld [vmem:[%s783 + $0x378] sm:$0xff]
    %v896 = vld [vmem:[%s783 + $0x380] sm:$0xff]
    %v897 = vld [vmem:[%s783 + $0x388] sm:$0xff]
    %v898 = vld [vmem:[%s783 + $0x390] sm:$0xff]
    %v899 = vld [vmem:[%s783 + $0x398] sm:$0xff]
    %v900 = vld [vmem:[%s783 + $0x3a0] sm:$0xff]
    %v901 = vld [vmem:[%s783 + $0x3a8] sm:$0xff]
    %v902 = vld [vmem:[%s783 + $0x3b0] sm:$0xff]
    %v903 = vld [vmem:[%s783 + $0x3b8] sm:$0xff]
    %v904 = vld [vmem:[%s783 + $0x3c0] sm:$0xff]
    %v905 = vld [vmem:[%s783 + $0x3c8] sm:$0xff]
    %v906 = vld [vmem:[%s783 + $0x3d0] sm:$0xff]
    %v907 = vld [vmem:[%s783 + $0x3d8] sm:$0xff]
    %v908 = vld [vmem:[%s783 + $0x3e0] sm:$0xff]
    %v909 = vld [vmem:[%s783 + $0x3e8] sm:$0xff]
    %v910 = vld [vmem:[%s783 + $0x3f0] sm:$0xff]
    %v911 = vld [vmem:[%s783 + $0x3f8] sm:$0xff]
    %v914 = vrot.slane %v653, 2
    %v915 = vrot.slane %v654, 2
    %918 = vmatprep.subr.mxu0 %v785
    %919 = vmatpush1.msra.mxu0 %v784
    %920 = vmatprep.subr.mxu0 %v789
    %921 = vmatpush1.msra.mxu0 %v788
    %922 = vmatprep.subr.mxu0 %v793
    %923 = vmatpush1.msra.mxu0 %v792
    %924 = vmatprep.subr.mxu0 %v797
    %925 = vmatpush1.msra.mxu0 %v796
    %926 = vmatprep.subr.mxu0 %v801
    %927 = vmatpush1.msra.mxu0 %v800
    %928 = vmatprep.subr.mxu0 %v805
    %929 = vmatpush1.msra.mxu0 %v804
    %930 = vmatprep.subr.mxu0 %v809
    %931 = vmatpush1.msra.mxu0 %v808
    %932 = vmatprep.subr.mxu0 %v813
    %933 = vmatpush1.msra.mxu0 %v812
    %934 = vmatprep.subr.mxu0 %v817
    %935 = vmatpush1.msra.mxu0 %v816
    %936 = vmatprep.subr.mxu0 %v821
    %937 = vmatpush1.msra.mxu0 %v820
    %938 = vmatprep.subr.mxu0 %v825
    %939 = vmatpush1.msra.mxu0 %v824
    %940 = vmatprep.subr.mxu0 %v829
    %941 = vmatpush1.msra.mxu0 %v828
    %942 = vmatprep.subr.mxu0 %v833
    %943 = vmatpush1.msra.mxu0 %v832
    %944 = vmatprep.subr.mxu0 %v837
    %945 = vmatpush1.msra.mxu0 %v836
    %946 = vmatprep.subr.mxu0 %v841
    %947 = vmatpush1.msra.mxu0 %v840
    %948 = vmatprep.subr.mxu0 %v845
    %949 = vmatpush1.msra.mxu0 %v844
    %950 = vmatprep.subr.mxu0 %v849
    %951 = vmatpush1.msra.mxu0 %v848
    %952 = vmatprep.subr.mxu0 %v853
    %953 = vmatpush1.msra.mxu0 %v852
    %954 = vmatprep.subr.mxu0 %v857
    %955 = vmatpush1.msra.mxu0 %v856
    %956 = vmatprep.subr.mxu0 %v861
    %957 = vmatpush1.msra.mxu0 %v860
    %958 = vmatprep.subr.mxu0 %v865
    %959 = vmatpush1.msra.mxu0 %v864
    %960 = vmatprep.subr.mxu0 %v869
    %961 = vmatpush1.msra.mxu0 %v868
    %962 = vmatprep.subr.mxu0 %v873
    %963 = vmatpush1.msra.mxu0 %v872
    %964 = vmatprep.subr.mxu0 %v877
    %965 = vmatpush1.msra.mxu0 %v876
    %966 = vmatprep.subr.mxu0 %v881
    %967 = vmatpush1.msra.mxu0 %v880
    %968 = vmatprep.subr.mxu0 %v885
    %969 = vmatpush1.msra.mxu0 %v884
    %970 = vmatprep.subr.mxu0 %v889
    %971 = vmatpush1.msra.mxu0 %v888
    %972 = vmatprep.subr.mxu0 %v893
    %973 = vmatpush1.msra.mxu0 %v892
    %974 = vmatprep.subr.mxu0 %v897
    %975 = vmatpush1.msra.mxu0 %v896
    %976 = vmatprep.subr.mxu0 %v901
    %977 = vmatpush1.msra.mxu0 %v900
    %978 = vmatprep.subr.mxu0 %v905
    %979 = vmatpush1.msra.mxu0 %v904
    %980 = vmatprep.subr.mxu0 %v909
    %981 = vmatpush1.msra.mxu0 %v908
    %982 = vmatprep.mubr.f32.mxu0 %v915
    %983 = vmatmul.mubr.f32.gmra.mrb[0].mxu0 %v914
    %v984 = vpop.f32.mrb[0].mxu0
    %v985 = vadd.f32 0.0, %v984
    %v986 = vpop.f32.mrb[0].mxu0
    %v987 = vadd.f32 0.0, %v986
    %988 = vdwg.mxu0
    %989 = vmatprep.subr.mxu0 %v787
    %990 = vmatpush1.msra.mxu0 %v786
    %991 = vmatprep.subr.mxu0 %v791
    %992 = vmatpush1.msra.mxu0 %v790
    %993 = vmatprep.subr.mxu0 %v795
    %994 = vmatpush1.msra.mxu0 %v794
    %995 = vmatprep.subr.mxu0 %v799
    %996 = vmatpush1.msra.mxu0 %v798
    %997 = vmatprep.subr.mxu0 %v803
    %998 = vmatpush1.msra.mxu0 %v802
    %999 = vmatprep.subr.mxu0 %v807
    %1000 = vmatpush1.msra.mxu0 %v806
    %1001 = vmatprep.subr.mxu0 %v811
    %1002 = vmatpush1.msra.mxu0 %v810
    %1003 = vmatprep.subr.mxu0 %v815
    %1004 = vmatpush1.msra.mxu0 %v814
    %1005 = vmatprep.subr.mxu0 %v819
    %1006 = vmatpush1.msra.mxu0 %v818
    %1007 = vmatprep.subr.mxu0 %v823
    %1008 = vmatpush1.msra.mxu0 %v822
    %1009 = vmatprep.subr.mxu0 %v827
    %1010 = vmatpush1.msra.mxu0 %v826
    %1011 = vmatprep.subr.mxu0 %v831
    %1012 = vmatpush1.msra.mxu0 %v830
    %1013 = vmatprep.subr.mxu0 %v835
    %1014 = vmatpush1.msra.mxu0 %v834
    %1015 = vmatprep.subr.mxu0 %v839
    %1016 = vmatpush1.msra.mxu0 %v838
    %1017 = vmatprep.subr.mxu0 %v843
    %1018 = vmatpush1.msra.mxu0 %v842
    %1019 = vmatprep.subr.mxu0 %v847
    %1020 = vmatpush1.msra.mxu0 %v846
    %1021 = vmatprep.subr.mxu0 %v851
    %1022 = vmatpush1.msra.mxu0 %v850
    %1023 = vmatprep.subr.mxu0 %v855
    %1024 = vmatpush1.msra.mxu0 %v854
    %1025 = vmatprep.subr.mxu0 %v859
    %1026 = vmatpush1.msra.mxu0 %v858
    %1027 = vmatprep.subr.mxu0 %v863
    %1028 = vmatpush1.msra.mxu0 %v862
    %1029 = vmatprep.subr.mxu0 %v867
    %1030 = vmatpush1.msra.mxu0 %v866
    %1031 = vmatprep.subr.mxu0 %v871
    %1032 = vmatpush1.msra.mxu0 %v870
    %1033 = vmatprep.subr.mxu0 %v875
    %1034 = vmatpush1.msra.mxu0 %v874
    %1035 = vmatprep.subr.mxu0 %v879
    %1036 = vmatpush1.msra.mxu0 %v878
    %1037 = vmatprep.subr.mxu0 %v883
    %1038 = vmatpush1.msra.mxu0 %v882
    %1039 = vmatprep.subr.mxu0 %v887
    %1040 = vmatpush1.msra.mxu0 %v886
    %1041 = vmatprep.subr.mxu0 %v891
    %1042 = vmatpush1.msra.mxu0 %v890
    %1043 = vmatprep.subr.mxu0 %v895
    %1044 = vmatpush1.msra.mxu0 %v894
    %1045 = vmatprep.subr.mxu0 %v899
    %1046 = vmatpush1.msra.mxu0 %v898
    %1047 = vmatprep.subr.mxu0 %v903
    %1048 = vmatpush1.msra.mxu0 %v902
    %1049 = vmatprep.subr.mxu0 %v907
    %1050 = vmatpush1.msra.mxu0 %v906
    %1051 = vmatprep.subr.mxu0 %v911
    %1052 = vmatpush1.msra.mxu0 %v910
    %1053 = vmatprep.mubr.f32.mxu0 %v915
    %1054 = vmatmul.mubr.f32.gmra.mrb[0].mxu0 %v914
    %v1055 = vpop.f32.mrb[0].mxu0
    %v1056 = vadd.f32 0.0, %v1055
    %v1057 = vpop.f32.mrb[0].mxu0
    %v1058 = vadd.f32 0.0, %v1057
    %1059 = vdwg.mxu0
    %1060 = vmatprep.subr.mxu0 %v656
    %1061 = vmatpush1.msra.mxu0 %v655
    %1062 = vmatprep.subr.mxu0 %v660
    %1063 = vmatpush1.msra.mxu0 %v659
    %1064 = vmatprep.subr.mxu0 %v664
    %1065 = vmatpush1.msra.mxu0 %v663
    %1066 = vmatprep.subr.mxu0 %v668
    %1067 = vmatpush1.msra.mxu0 %v667
    %1068 = vmatprep.subr.mxu0 %v672
    %1069 = vmatpush1.msra.mxu0 %v671
    %1070 = vmatprep.subr.mxu0 %v676
    %1071 = vmatpush1.msra.mxu0 %v675
    %1072 = vmatprep.subr.mxu0 %v680
    %1073 = vmatpush1.msra.mxu0 %v679
    %1074 = vmatprep.subr.mxu0 %v684
    %1075 = vmatpush1.msra.mxu0 %v683
    %1076 = vmatprep.subr.mxu0 %v688
    %1077 = vmatpush1.msra.mxu0 %v687
    %1078 = vmatprep.subr.mxu0 %v692
    %1079 = vmatpush1.msra.mxu0 %v691
    %1080 = vmatprep.subr.mxu0 %v696
    %1081 = vmatpush1.msra.mxu0 %v695
    %1082 = vmatprep.subr.mxu0 %v700
    %1083 = vmatpush1.msra.mxu0 %v699
    %1084 = vmatprep.subr.mxu0 %v704
    %1085 = vmatpush1.msra.mxu0 %v703
    %1086 = vmatprep.subr.mxu0 %v708
    %1087 = vmatpush1.msra.mxu0 %v707
    %1088 = vmatprep.subr.mxu0 %v712
    %1089 = vmatpush1.msra.mxu0 %v711
    %1090 = vmatprep.subr.mxu0 %v716
    %1091 = vmatpush1.msra.mxu0 %v715
    %1092 = vmatprep.subr.mxu0 %v720
    %1093 = vmatpush1.msra.mxu0 %v719
    %1094 = vmatprep.subr.mxu0 %v724
    %1095 = vmatpush1.msra.mxu0 %v723
    %1096 = vmatprep.subr.mxu0 %v728
    %1097 = vmatpush1.msra.mxu0 %v727
    %1098 = vmatprep.subr.mxu0 %v732
    %1099 = vmatpush1.msra.mxu0 %v731
    %1100 = vmatprep.subr.mxu0 %v736
    %1101 = vmatpush1.msra.mxu0 %v735
    %1102 = vmatprep.subr.mxu0 %v740
    %1103 = vmatpush1.msra.mxu0 %v739
    %1104 = vmatprep.subr.mxu0 %v744
    %1105 = vmatpush1.msra.mxu0 %v743
    %1106 = vmatprep.subr.mxu0 %v748
    %1107 = vmatpush1.msra.mxu0 %v747
    %1108 = vmatprep.subr.mxu0 %v752
    %1109 = vmatpush1.msra.mxu0 %v751
    %1110 = vmatprep.subr.mxu0 %v756
    %1111 = vmatpush1.msra.mxu0 %v755
    %1112 = vmatprep.subr.mxu0 %v760
    %1113 = vmatpush1.msra.mxu0 %v759
    %1114 = vmatprep.subr.mxu0 %v764
    %1115 = vmatpush1.msra.mxu0 %v763
    %1116 = vmatprep.subr.mxu0 %v768
    %1117 = vmatpush1.msra.mxu0 %v767
    %1118 = vmatprep.subr.mxu0 %v772
    %1119 = vmatpush1.msra.mxu0 %v771
    %1120 = vmatprep.subr.mxu0 %v776
    %1121 = vmatpush1.msra.mxu0 %v775
    %1122 = vmatprep.subr.mxu0 %v780
    %1123 = vmatpush1.msra.mxu0 %v779
    %1124 = vmatprep.mubr.f32.mxu0 %v654
    %1125 = vmatmul.mubr.f32.gmra.mrb[0].mxu0 %v653
    %v1126 = vpop.f32.mrb[0].mxu0
    %v1127 = vadd.f32 %v985, %v1126
    %v1128 = vpop.f32.mrb[0].mxu0
    %v1129 = vadd.f32 %v987, %v1128
    %1130 = vdwg.mxu0
    %1131 = vmatprep.subr.mxu0 %v658
    %1132 = vmatpush1.msra.mxu0 %v657
    %1133 = vmatprep.subr.mxu0 %v662
    %1134 = vmatpush1.msra.mxu0 %v661
    %1135 = vmatprep.subr.mxu0 %v666
    %1136 = vmatpush1.msra.mxu0 %v665
    %1137 = vmatprep.subr.mxu0 %v670
    %1138 = vmatpush1.msra.mxu0 %v669
    %1139 = vmatprep.subr.mxu0 %v674
    %1140 = vmatpush1.msra.mxu0 %v673
    %1141 = vmatprep.subr.mxu0 %v678
    %1142 = vmatpush1.msra.mxu0 %v677
    %1143 = vmatprep.subr.mxu0 %v682
    %1144 = vmatpush1.msra.mxu0 %v681
    %1145 = vmatprep.subr.mxu0 %v686
    %1146 = vmatpush1.msra.mxu0 %v685
    %1147 = vmatprep.subr.mxu0 %v690
    %1148 = vmatpush1.msra.mxu0 %v689
    %1149 = vmatprep.subr.mxu0 %v694
    %1150 = vmatpush1.msra.mxu0 %v693
    %1151 = vmatprep.subr.mxu0 %v698
    %1152 = vmatpush1.msra.mxu0 %v697
    %1153 = vmatprep.subr.mxu0 %v702
    %1154 = vmatpush1.msra.mxu0 %v701
    %1155 = vmatprep.subr.mxu0 %v706
    %1156 = vmatpush1.msra.mxu0 %v705
    %1157 = vmatprep.subr.mxu0 %v710
    %1158 = vmatpush1.msra.mxu0 %v709
    %1159 = vmatprep.subr.mxu0 %v714
    %1160 = vmatpush1.msra.mxu0 %v713
    %1161 = vmatprep.subr.mxu0 %v718
    %1162 = vmatpush1.msra.mxu0 %v717
    %1163 = vmatprep.subr.mxu0 %v722
    %1164 = vmatpush1.msra.mxu0 %v721
    %1165 = vmatprep.subr.mxu0 %v726
    %1166 = vmatpush1.msra.mxu0 %v725
    %1167 = vmatprep.subr.mxu0 %v730
    %1168 = vmatpush1.msra.mxu0 %v729
    %1169 = vmatprep.subr.mxu0 %v734
    %1170 = vmatpush1.msra.mxu0 %v733
    %1171 = vmatprep.subr.mxu0 %v738
    %1172 = vmatpush1.msra.mxu0 %v737
    %1173 = vmatprep.subr.mxu0 %v742
    %1174 = vmatpush1.msra.mxu0 %v741
    %1175 = vmatprep.subr.mxu0 %v746
    %1176 = vmatpush1.msra.mxu0 %v745
    %1177 = vmatprep.subr.mxu0 %v750
    %1178 = vmatpush1.msra.mxu0 %v749
    %1179 = vmatprep.subr.mxu0 %v754
    %1180 = vmatpush1.msra.mxu0 %v753
    %1181 = vmatprep.subr.mxu0 %v758
    %1182 = vmatpush1.msra.mxu0 %v757
    %1183 = vmatprep.subr.mxu0 %v762
    %1184 = vmatpush1.msra.mxu0 %v761
    %1185 = vmatprep.subr.mxu0 %v766
    %1186 = vmatpush1.msra.mxu0 %v765
    %1187 = vmatprep.subr.mxu0 %v770
    %1188 = vmatpush1.msra.mxu0 %v769
    %1189 = vmatprep.subr.mxu0 %v774
    %1190 = vmatpush1.msra.mxu0 %v773
    %1191 = vmatprep.subr.mxu0 %v778
    %1192 = vmatpush1.msra.mxu0 %v777
    %1193 = vmatprep.subr.mxu0 %v782
    %1194 = vmatpush1.msra.mxu0 %v781
    %1195 = vmatprep.mubr.f32.mxu0 %v654
    %1196 = vmatmul.mubr.f32.gmra.mrb[0].mxu0 %v653
    %v1197 = vpop.f32.mrb[0].mxu0
    %v1198 = vadd.f32 %v1056, %v1197
    %v1199 = vpop.f32.mrb[0].mxu0
    %v1200 = vadd.f32 %v1058, %v1199
    %1201 = vdwg.mxu0
    %s1202 = scalar_lea.vmem %s3, 2048
    %v1203 = vld [vmem:[%s1202] sm:$0xff]
    %v1204 = vld [vmem:[%s1202 + $0x8] sm:$0xff]
    %v1205 = vld [vmem:[%s1202 + $0x10] sm:$0xff]
    %v1206 = vld [vmem:[%s1202 + $0x18] sm:$0xff]
    %v1207 = vld [vmem:[%s1202 + $0x20] sm:$0xff]
    %v1208 = vld [vmem:[%s1202 + $0x28] sm:$0xff]
    %v1209 = vld [vmem:[%s1202 + $0x30] sm:$0xff]
    %v1210 = vld [vmem:[%s1202 + $0x38] sm:$0xff]
    %v1211 = vld [vmem:[%s1202 + $0x40] sm:$0xff]
    %v1212 = vld [vmem:[%s1202 + $0x48] sm:$0xff]
    %v1213 = vld [vmem:[%s1202 + $0x50] sm:$0xff]
    %v1214 = vld [vmem:[%s1202 + $0x58] sm:$0xff]
    %v1215 = vld [vmem:[%s1202 + $0x60] sm:$0xff]
    %v1216 = vld [vmem:[%s1202 + $0x68] sm:$0xff]
    %v1217 = vld [vmem:[%s1202 + $0x70] sm:$0xff]
    %v1218 = vld [vmem:[%s1202 + $0x78] sm:$0xff]
    %v1219 = vld [vmem:[%s1202 + $0x80] sm:$0xff]
    %v1220 = vld [vmem:[%s1202 + $0x88] sm:$0xff]
    %v1221 = vld [vmem:[%s1202 + $0x90] sm:$0xff]
    %v1222 = vld [vmem:[%s1202 + $0x98] sm:$0xff]
    %v1223 = vld [vmem:[%s1202 + $0xa0] sm:$0xff]
    %v1224 = vld [vmem:[%s1202 + $0xa8] sm:$0xff]
    %v1225 = vld [vmem:[%s1202 + $0xb0] sm:$0xff]
    %v1226 = vld [vmem:[%s1202 + $0xb8] sm:$0xff]
    %v1227 = vld [vmem:[%s1202 + $0xc0] sm:$0xff]
    %v1228 = vld [vmem:[%s1202 + $0xc8] sm:$0xff]
    %v1229 = vld [vmem:[%s1202 + $0xd0] sm:$0xff]
    %v1230 = vld [vmem:[%s1202 + $0xd8] sm:$0xff]
    %v1231 = vld [vmem:[%s1202 + $0xe0] sm:$0xff]
    %v1232 = vld [vmem:[%s1202 + $0xe8] sm:$0xff]
    %v1233 = vld [vmem:[%s1202 + $0xf0] sm:$0xff]
    %v1234 = vld [vmem:[%s1202 + $0xf8] sm:$0xff]
    %v1235 = vld [vmem:[%s1202 + $0x100] sm:$0xff]
    %v1236 = vld [vmem:[%s1202 + $0x108] sm:$0xff]
    %v1237 = vld [vmem:[%s1202 + $0x110] sm:$0xff]
    %v1238 = vld [vmem:[%s1202 + $0x118] sm:$0xff]
    %v1239 = vld [vmem:[%s1202 + $0x120] sm:$0xff]
    %v1240 = vld [vmem:[%s1202 + $0x128] sm:$0xff]
    %v1241 = vld [vmem:[%s1202 + $0x130] sm:$0xff]
    %v1242 = vld [vmem:[%s1202 + $0x138] sm:$0xff]
    %v1243 = vld [vmem:[%s1202 + $0x140] sm:$0xff]
    %v1244 = vld [vmem:[%s1202 + $0x148] sm:$0xff]
    %v1245 = vld [vmem:[%s1202 + $0x150] sm:$0xff]
    %v1246 = vld [vmem:[%s1202 + $0x158] sm:$0xff]
    %v1247 = vld [vmem:[%s1202 + $0x160] sm:$0xff]
    %v1248 = vld [vmem:[%s1202 + $0x168] sm:$0xff]
    %v1249 = vld [vmem:[%s1202 + $0x170] sm:$0xff]
    %v1250 = vld [vmem:[%s1202 + $0x178] sm:$0xff]
    %v1251 = vld [vmem:[%s1202 + $0x180] sm:$0xff]
    %v1252 = vld [vmem:[%s1202 + $0x188] sm:$0xff]
    %v1253 = vld [vmem:[%s1202 + $0x190] sm:$0xff]
    %v1254 = vld [vmem:[%s1202 + $0x198] sm:$0xff]
    %v1255 = vld [vmem:[%s1202 + $0x1a0] sm:$0xff]
    %v1256 = vld [vmem:[%s1202 + $0x1a8] sm:$0xff]
    %v1257 = vld [vmem:[%s1202 + $0x1b0] sm:$0xff]
    %v1258 = vld [vmem:[%s1202 + $0x1b8] sm:$0xff]
    %v1259 = vld [vmem:[%s1202 + $0x1c0] sm:$0xff]
    %v1260 = vld [vmem:[%s1202 + $0x1c8] sm:$0xff]
    %v1261 = vld [vmem:[%s1202 + $0x1d0] sm:$0xff]
    %v1262 = vld [vmem:[%s1202 + $0x1d8] sm:$0xff]
    %v1263 = vld [vmem:[%s1202 + $0x1e0] sm:$0xff]
    %v1264 = vld [vmem:[%s1202 + $0x1e8] sm:$0xff]
    %v1265 = vld [vmem:[%s1202 + $0x1f0] sm:$0xff]
    %v1266 = vld [vmem:[%s1202 + $0x1f8] sm:$0xff]
    %v1267 = vld [vmem:[%s1202 + $0x200] sm:$0xff]
    %v1268 = vld [vmem:[%s1202 + $0x208] sm:$0xff]
    %v1269 = vld [vmem:[%s1202 + $0x210] sm:$0xff]
    %v1270 = vld [vmem:[%s1202 + $0x218] sm:$0xff]
    %v1271 = vld [vmem:[%s1202 + $0x220] sm:$0xff]
    %v1272 = vld [vmem:[%s1202 + $0x228] sm:$0xff]
    %v1273 = vld [vmem:[%s1202 + $0x230] sm:$0xff]
    %v1274 = vld [vmem:[%s1202 + $0x238] sm:$0xff]
    %v1275 = vld [vmem:[%s1202 + $0x240] sm:$0xff]
    %v1276 = vld [vmem:[%s1202 + $0x248] sm:$0xff]
    %v1277 = vld [vmem:[%s1202 + $0x250] sm:$0xff]
    %v1278 = vld [vmem:[%s1202 + $0x258] sm:$0xff]
    %v1279 = vld [vmem:[%s1202 + $0x260] sm:$0xff]
    %v1280 = vld [vmem:[%s1202 + $0x268] sm:$0xff]
    %v1281 = vld [vmem:[%s1202 + $0x270] sm:$0xff]
    %v1282 = vld [vmem:[%s1202 + $0x278] sm:$0xff]
    %v1283 = vld [vmem:[%s1202 + $0x280] sm:$0xff]
    %v1284 = vld [vmem:[%s1202 + $0x288] sm:$0xff]
    %v1285 = vld [vmem:[%s1202 + $0x290] sm:$0xff]
    %v1286 = vld [vmem:[%s1202 + $0x298] sm:$0xff]
    %v1287 = vld [vmem:[%s1202 + $0x2a0] sm:$0xff]
    %v1288 = vld [vmem:[%s1202 + $0x2a8] sm:$0xff]
    %v1289 = vld [vmem:[%s1202 + $0x2b0] sm:$0xff]
    %v1290 = vld [vmem:[%s1202 + $0x2b8] sm:$0xff]
    %v1291 = vld [vmem:[%s1202 + $0x2c0] sm:$0xff]
    %v1292 = vld [vmem:[%s1202 + $0x2c8] sm:$0xff]
    %v1293 = vld [vmem:[%s1202 + $0x2d0] sm:$0xff]
    %v1294 = vld [vmem:[%s1202 + $0x2d8] sm:$0xff]
    %v1295 = vld [vmem:[%s1202 + $0x2e0] sm:$0xff]
    %v1296 = vld [vmem:[%s1202 + $0x2e8] sm:$0xff]
    %v1297 = vld [vmem:[%s1202 + $0x2f0] sm:$0xff]
    %v1298 = vld [vmem:[%s1202 + $0x2f8] sm:$0xff]
    %v1299 = vld [vmem:[%s1202 + $0x300] sm:$0xff]
    %v1300 = vld [vmem:[%s1202 + $0x308] sm:$0xff]
    %v1301 = vld [vmem:[%s1202 + $0x310] sm:$0xff]
    %v1302 = vld [vmem:[%s1202 + $0x318] sm:$0xff]
    %v1303 = vld [vmem:[%s1202 + $0x320] sm:$0xff]
    %v1304 = vld [vmem:[%s1202 + $0x328] sm:$0xff]
    %v1305 = vld [vmem:[%s1202 + $0x330] sm:$0xff]
    %v1306 = vld [vmem:[%s1202 + $0x338] sm:$0xff]
    %v1307 = vld [vmem:[%s1202 + $0x340] sm:$0xff]
    %v1308 = vld [vmem:[%s1202 + $0x348] sm:$0xff]
    %v1309 = vld [vmem:[%s1202 + $0x350] sm:$0xff]
    %v1310 = vld [vmem:[%s1202 + $0x358] sm:$0xff]
    %v1311 = vld [vmem:[%s1202 + $0x360] sm:$0xff]
    %v1312 = vld [vmem:[%s1202 + $0x368] sm:$0xff]
    %v1313 = vld [vmem:[%s1202 + $0x370] sm:$0xff]
    %v1314 = vld [vmem:[%s1202 + $0x378] sm:$0xff]
    %v1315 = vld [vmem:[%s1202 + $0x380] sm:$0xff]
    %v1316 = vld [vmem:[%s1202 + $0x388] sm:$0xff]
    %v1317 = vld [vmem:[%s1202 + $0x390] sm:$0xff]
    %v1318 = vld [vmem:[%s1202 + $0x398] sm:$0xff]
    %v1319 = vld [vmem:[%s1202 + $0x3a0] sm:$0xff]
    %v1320 = vld [vmem:[%s1202 + $0x3a8] sm:$0xff]
    %v1321 = vld [vmem:[%s1202 + $0x3b0] sm:$0xff]
    %v1322 = vld [vmem:[%s1202 + $0x3b8] sm:$0xff]
    %v1323 = vld [vmem:[%s1202 + $0x3c0] sm:$0xff]
    %v1324 = vld [vmem:[%s1202 + $0x3c8] sm:$0xff]
    %v1325 = vld [vmem:[%s1202 + $0x3d0] sm:$0xff]
    %v1326 = vld [vmem:[%s1202 + $0x3d8] sm:$0xff]
    %v1327 = vld [vmem:[%s1202 + $0x3e0] sm:$0xff]
    %v1328 = vld [vmem:[%s1202 + $0x3e8] sm:$0xff]
    %v1329 = vld [vmem:[%s1202 + $0x3f0] sm:$0xff]
    %v1330 = vld [vmem:[%s1202 + $0x3f8] sm:$0xff]
    %v1331 = vrot.slane %v653, 4
    %v1332 = vrot.slane %v654, 4
    %1335 = vmatprep.subr.mxu0 %v1204
    %1336 = vmatpush1.msra.mxu0 %v1203
    %1337 = vmatprep.subr.mxu0 %v1208
    %1338 = vmatpush1.msra.mxu0 %v1207
    %1339 = vmatprep.subr.mxu0 %v1212
    %1340 = vmatpush1.msra.mxu0 %v1211
    %1341 = vmatprep.subr.mxu0 %v1216
    %1342 = vmatpush1.msra.mxu0 %v1215
    %1343 = vmatprep.subr.mxu0 %v1220
    %1344 = vmatpush1.msra.mxu0 %v1219
    %1345 = vmatprep.subr.mxu0 %v1224
    %1346 = vmatpush1.msra.mxu0 %v1223
    %1347 = vmatprep.subr.mxu0 %v1228
    %1348 = vmatpush1.msra.mxu0 %v1227
    %1349 = vmatprep.subr.mxu0 %v1232
    %1350 = vmatpush1.msra.mxu0 %v1231
    %1351 = vmatprep.subr.mxu0 %v1236
    %1352 = vmatpush1.msra.mxu0 %v1235
    %1353 = vmatprep.subr.mxu0 %v1240
    %1354 = vmatpush1.msra.mxu0 %v1239
    %1355 = vmatprep.subr.mxu0 %v1244
    %1356 = vmatpush1.msra.mxu0 %v1243
    %1357 = vmatprep.subr.mxu0 %v1248
    %1358 = vmatpush1.msra.mxu0 %v1247
    %1359 = vmatprep.subr.mxu0 %v1252
    %1360 = vmatpush1.msra.mxu0 %v1251
    %1361 = vmatprep.subr.mxu0 %v1256
    %1362 = vmatpush1.msra.mxu0 %v1255
    %1363 = vmatprep.subr.mxu0 %v1260
    %1364 = vmatpush1.msra.mxu0 %v1259
    %1365 = vmatprep.subr.mxu0 %v1264
    %1366 = vmatpush1.msra.mxu0 %v1263
    %1367 = vmatprep.subr.mxu0 %v1268
    %1368 = vmatpush1.msra.mxu0 %v1267
    %1369 = vmatprep.subr.mxu0 %v1272
    %1370 = vmatpush1.msra.mxu0 %v1271
    %1371 = vmatprep.subr.mxu0 %v1276
    %1372 = vmatpush1.msra.mxu0 %v1275
    %1373 = vmatprep.subr.mxu0 %v1280
    %1374 = vmatpush1.msra.mxu0 %v1279
    %1375 = vmatprep.subr.mxu0 %v1284
    %1376 = vmatpush1.msra.mxu0 %v1283
    %1377 = vmatprep.subr.mxu0 %v1288
    %1378 = vmatpush1.msra.mxu0 %v1287
    %1379 = vmatprep.subr.mxu0 %v1292
    %1380 = vmatpush1.msra.mxu0 %v1291
    %1381 = vmatprep.subr.mxu0 %v1296
    %1382 = vmatpush1.msra.mxu0 %v1295
    %1383 = vmatprep.subr.mxu0 %v1300
    %1384 = vmatpush1.msra.mxu0 %v1299
    %1385 = vmatprep.subr.mxu0 %v1304
    %1386 = vmatpush1.msra.mxu0 %v1303
    %1387 = vmatprep.subr.mxu0 %v1308
    %1388 = vmatpush1.msra.mxu0 %v1307
    %1389 = vmatprep.subr.mxu0 %v1312
    %1390 = vmatpush1.msra.mxu0 %v1311
    %1391 = vmatprep.subr.mxu0 %v1316
    %1392 = vmatpush1.msra.mxu0 %v1315
    %1393 = vmatprep.subr.mxu0 %v1320
    %1394 = vmatpush1.msra.mxu0 %v1319
    %1395 = vmatprep.subr.mxu0 %v1324
    %1396 = vmatpush1.msra.mxu0 %v1323
    %1397 = vmatprep.subr.mxu0 %v1328
    %1398 = vmatpush1.msra.mxu0 %v1327
    %1399 = vmatprep.mubr.f32.mxu0 %v1332
    %1400 = vmatmul.mubr.f32.gmra.mrb[0].mxu0 %v1331
    %v1401 = vpop.f32.mrb[0].mxu0
    %v1402 = vadd.f32 0.0, %v1401
    %v1403 = vpop.f32.mrb[0].mxu0
    %v1404 = vadd.f32 0.0, %v1403
    %1405 = vdwg.mxu0
    %1406 = vmatprep.subr.mxu0 %v1206
    %1407 = vmatpush1.msra.mxu0 %v1205
    %1408 = vmatprep.subr.mxu0 %v1210
    %1409 = vmatpush1.msra.mxu0 %v1209
    %1410 = vmatprep.subr.mxu0 %v1214
    %1411 = vmatpush1.msra.mxu0 %v1213
    %1412 = vmatprep.subr.mxu0 %v1218
    %1413 = vmatpush1.msra.mxu0 %v1217
    %1414 = vmatprep.subr.mxu0 %v1222
    %1415 = vmatpush1.msra.mxu0 %v1221
    %1416 = vmatprep.subr.mxu0 %v1226
    %1417 = vmatpush1.msra.mxu0 %v1225
    %1418 = vmatprep.subr.mxu0 %v1230
    %1419 = vmatpush1.msra.mxu0 %v1229
    %1420 = vmatprep.subr.mxu0 %v1234
    %1421 = vmatpush1.msra.mxu0 %v1233
    %1422 = vmatprep.subr.mxu0 %v1238
    %1423 = vmatpush1.msra.mxu0 %v1237
    %1424 = vmatprep.subr.mxu0 %v1242
    %1425 = vmatpush1.msra.mxu0 %v1241
    %1426 = vmatprep.subr.mxu0 %v1246
    %1427 = vmatpush1.msra.mxu0 %v1245
    %1428 = vmatprep.subr.mxu0 %v1250
    %1429 = vmatpush1.msra.mxu0 %v1249
    %1430 = vmatprep.subr.mxu0 %v1254
    %1431 = vmatpush1.msra.mxu0 %v1253
    %1432 = vmatprep.subr.mxu0 %v1258
    %1433 = vmatpush1.msra.mxu0 %v1257
    %1434 = vmatprep.subr.mxu0 %v1262
    %1435 = vmatpush1.msra.mxu0 %v1261
    %1436 = vmatprep.subr.mxu0 %v1266
    %1437 = vmatpush1.msra.mxu0 %v1265
    %1438 = vmatprep.subr.mxu0 %v1270
    %1439 = vmatpush1.msra.mxu0 %v1269
    %1440 = vmatprep.subr.mxu0 %v1274
    %1441 = vmatpush1.msra.mxu0 %v1273
    %1442 = vmatprep.subr.mxu0 %v1278
    %1443 = vmatpush1.msra.mxu0 %v1277
    %1444 = vmatprep.subr.mxu0 %v1282
    %1445 = vmatpush1.msra.mxu0 %v1281
    %1446 = vmatprep.subr.mxu0 %v1286
    %1447 = vmatpush1.msra.mxu0 %v1285
    %1448 = vmatprep.subr.mxu0 %v1290
    %1449 = vmatpush1.msra.mxu0 %v1289
    %1450 = vmatprep.subr.mxu0 %v1294
    %1451 = vmatpush1.msra.mxu0 %v1293
    %1452 = vmatprep.subr.mxu0 %v1298
    %1453 = vmatpush1.msra.mxu0 %v1297
    %1454 = vmatprep.subr.mxu0 %v1302
    %1455 = vmatpush1.msra.mxu0 %v1301
    %1456 = vmatprep.subr.mxu0 %v1306
    %1457 = vmatpush1.msra.mxu0 %v1305
    %1458 = vmatprep.subr.mxu0 %v1310
    %1459 = vmatpush1.msra.mxu0 %v1309
    %1460 = vmatprep.subr.mxu0 %v1314
    %1461 = vmatpush1.msra.mxu0 %v1313
    %1462 = vmatprep.subr.mxu0 %v1318
    %1463 = vmatpush1.msra.mxu0 %v1317
    %1464 = vmatprep.subr.mxu0 %v1322
    %1465 = vmatpush1.msra.mxu0 %v1321
    %1466 = vmatprep.subr.mxu0 %v1326
    %1467 = vmatpush1.msra.mxu0 %v1325
    %1468 = vmatprep.subr.mxu0 %v1330
    %1469 = vmatpush1.msra.mxu0 %v1329
    %1470 = vmatprep.mubr.f32.mxu0 %v1332
    %1471 = vmatmul.mubr.f32.gmra.mrb[0].mxu0 %v1331
    %v1472 = vpop.f32.mrb[0].mxu0
    %v1473 = vadd.f32 0.0, %v1472
    %v1474 = vpop.f32.mrb[0].mxu0
    %v1475 = vadd.f32 0.0, %v1474
    %1476 = vdwg.mxu0
    %v1477 = vadd.f32 %v1127, %v1402
    %v1478 = vadd.f32 %v1129, %v1404
    %v1479 = vadd.f32 %v1198, %v1473
    %v1480 = vadd.f32 %v1200, %v1475
    %v1485 = vrot.slane %v1477, 2
    %v1486 = vrot.slane %v1478, 2
    %v1487 = vrot.slane %v1479, 2
    %v1488 = vrot.slane %v1480, 2
    %v1493 = vmax.f32 %v1477, %v1485
    %v1494 = vmax.f32 %v1478, %v1486
    %v1495 = vmax.f32 %v1479, %v1487
    %v1496 = vmax.f32 %v1480, %v1488
    %v1497 = vmax.f32 %v1493, %v1495
    %v1498 = vmax.f32 %v1494, %v1496
    %v1499 = vld [vmem:[%s4] sm:$0x3]
    %v1501 = vlaneseq
    %v1502 = vshrl.u32 %v1501, 7
    %v1503 = vsub.s32 0, %v1502
    %v1504 = vrot.slane %v1499, %v1503
    %v1505 = vlaneseq
    %v1506 = vshrl.u32 %v1505, 7
    %v1507 = vsub.s32 1, %v1506
    %v1508 = vrot.slane %v1499, %v1507
    %v1511 = vadd.f32 %v1497, %v1504
    %v1512 = vadd.f32 %v1498, %v1508
    %v1513 = vld [vmem:[%s5] sm:$0xff]
    %v1514 = vld [vmem:[%s5 + $0x8] sm:$0xff]
    %v1515 = vld [vmem:[%s5 + $0x10] sm:$0xff]
    %v1516 = vld [vmem:[%s5 + $0x18] sm:$0xff]
    %v1517 = vld [vmem:[%s5 + $0x20] sm:$0xff]
    %v1518 = vld [vmem:[%s5 + $0x28] sm:$0xff]
    %v1519 = vld [vmem:[%s5 + $0x30] sm:$0xff]
    %v1520 = vld [vmem:[%s5 + $0x38] sm:$0xff]
    %v1521 = vld [vmem:[%s5 + $0x40] sm:$0xff]
    %v1522 = vld [vmem:[%s5 + $0x48] sm:$0xff]
    %v1523 = vld [vmem:[%s5 + $0x50] sm:$0xff]
    %v1524 = vld [vmem:[%s5 + $0x58] sm:$0xff]
    %v1525 = vld [vmem:[%s5 + $0x60] sm:$0xff]
    %v1526 = vld [vmem:[%s5 + $0x68] sm:$0xff]
    %v1527 = vld [vmem:[%s5 + $0x70] sm:$0xff]
    %v1528 = vld [vmem:[%s5 + $0x78] sm:$0xff]
    %v1529 = vld [vmem:[%s5 + $0x80] sm:$0xff]
    %v1530 = vld [vmem:[%s5 + $0x88] sm:$0xff]
    %v1531 = vld [vmem:[%s5 + $0x90] sm:$0xff]
    %v1532 = vld [vmem:[%s5 + $0x98] sm:$0xff]
    %v1533 = vld [vmem:[%s5 + $0xa0] sm:$0xff]
    %v1534 = vld [vmem:[%s5 + $0xa8] sm:$0xff]
    %v1535 = vld [vmem:[%s5 + $0xb0] sm:$0xff]
    %v1536 = vld [vmem:[%s5 + $0xb8] sm:$0xff]
    %v1537 = vld [vmem:[%s6] sm:$0x1]
    %v1539 = vlaneseq
    %v1540 = vshrl.u32 %v1539, 7
    %v1541 = vsub.s32 0, %v1540
    %v1542 = vrot.slane %v1537, %v1541
    %vm1544 = vcmask 523264
    %v1546 = vsel %vm1544, %v1512, 0
    %1548 = vmatprep.subr.mxu0 0.0
    %1549 = vmatpush1.msra.mxu0 %v1513
    %1550 = vmatprep.subr.mxu0 0.0
    %1551 = vmatpush1.msra.mxu0 %v1514
    %1552 = vmatprep.subr.mxu0 0.0
    %1553 = vmatpush1.msra.mxu0 %v1515
    %1554 = vmatprep.subr.mxu0 0.0
    %1555 = vmatpush1.msra.mxu0 %v1516
    %1556 = vmatprep.subr.mxu0 0.0
    %1557 = vmatpush1.msra.mxu0 %v1517
    %1558 = vmatprep.subr.mxu0 0.0
    %1559 = vmatpush1.msra.mxu0 %v1518
    %1560 = vmatprep.subr.mxu0 0.0
    %1561 = vmatpush1.msra.mxu0 %v1519
    %1562 = vmatprep.subr.mxu0 0.0
    %1563 = vmatpush1.msra.mxu0 %v1520
    %1564 = vmatprep.subr.mxu0 0.0
    %1565 = vmatpush1.msra.mxu0 %v1521
    %1566 = vmatprep.subr.mxu0 0.0
    %1567 = vmatpush1.msra.mxu0 %v1522
    %1568 = vmatprep.subr.mxu0 0.0
    %1569 = vmatpush1.msra.mxu0 %v1523
    %1570 = vmatprep.subr.mxu0 0.0
    %1571 = vmatpush1.msra.mxu0 %v1524
    %1572 = vmatprep.subr.mxu0 0.0
    %1573 = vmatpush1.msra.mxu0 %v1525
    %1574 = vmatprep.subr.mxu0 0.0
    %1575 = vmatpush1.msra.mxu0 %v1526
    %1576 = vmatprep.subr.mxu0 0.0
    %1577 = vmatpush1.msra.mxu0 %v1527
    %1578 = vmatprep.subr.mxu0 0.0
    %1579 = vmatpush1.msra.mxu0 %v1528
    %1580 = vmatprep.subr.mxu0 0.0
    %1581 = vmatpush1.msra.mxu0 %v1529
    %1582 = vmatprep.subr.mxu0 0.0
    %1583 = vmatpush1.msra.mxu0 %v1530
    %1584 = vmatprep.subr.mxu0 0.0
    %1585 = vmatpush1.msra.mxu0 %v1531
    %1586 = vmatprep.subr.mxu0 0.0
    %1587 = vmatpush1.msra.mxu0 %v1532
    %1588 = vmatprep.subr.mxu0 0.0
    %1589 = vmatpush1.msra.mxu0 %v1533
    %1590 = vmatprep.subr.mxu0 0.0
    %1591 = vmatpush1.msra.mxu0 %v1534
    %1592 = vmatprep.subr.mxu0 0.0
    %1593 = vmatpush1.msra.mxu0 %v1535
    %1594 = vmatprep.subr.mxu0 0.0
    %1595 = vmatpush1.msra.mxu0 %v1536
    %1596 = vmatprep.subr.mxu0 0.0
    %1597 = vmatpush1.msra.mxu0 0.0
    %1598 = vmatprep.subr.mxu0 0.0
    %1599 = vmatpush1.msra.mxu0 0.0
    %1600 = vmatprep.subr.mxu0 0.0
    %1601 = vmatpush1.msra.mxu0 0.0
    %1602 = vmatprep.subr.mxu0 0.0
    %1603 = vmatpush1.msra.mxu0 0.0
    %1604 = vmatprep.subr.mxu0 0.0
    %1605 = vmatpush1.msra.mxu0 0.0
    %1606 = vmatprep.subr.mxu0 0.0
    %1607 = vmatpush1.msra.mxu0 0.0
    %1608 = vmatprep.subr.mxu0 0.0
    %1609 = vmatpush1.msra.mxu0 0.0
    %1610 = vmatprep.subr.mxu0 0.0
    %1611 = vmatpush1.msra.mxu0 0.0
    %1612 = vmatprep.mubr.f32.mxu0 %v1546
    %1613 = vmatmul.mubr.f32.gmra.mrb[0].mxu0 %v1511
    %v1614 = vpop.f32.mrb[0].mxu0
    %v1615 = vadd.f32 %v1542, %v1614
    %v1616 = vpop.f32.mrb[0].mxu0
    %1617 = vdwg.mxu0
    %vm1618 = vcmp.gt.f32.partialorder %v1615, 0.0
    %v1619 = vmul.f32 %v1615, 0.1
    %v1620 = vsel %vm1618, %v1615, %v1619
    %v1621 = vld [vmem:[%s7] sm:$0xff]
    %v1622 = vld [vmem:[%s7 + $0x8] sm:$0xff]
    %v1623 = vld [vmem:[%s7 + $0x10] sm:$0xff]
    %v1624 = vld [vmem:[%s7 + $0x18] sm:$0xff]
    %v1625 = vld [vmem:[%s7 + $0x20] sm:$0xff]
    %v1626 = vld [vmem:[%s7 + $0x28] sm:$0xff]
    %v1627 = vld [vmem:[%s7 + $0x30] sm:$0xff]
    %v1628 = vld [vmem:[%s7 + $0x38] sm:$0xff]
    %v1629 = vld [vmem:[%s8] sm:$0x1]
    %v1631 = vlaneseq
    %v1632 = vshrl.u32 %v1631, 7
    %v1633 = vsub.s32 0, %v1632
    %v1634 = vrot.slane %v1629, %v1633
    %v1637 = vsel %vm1544, %v1620, 0
    %1639 = vmatprep.subr.mxu0 0.0
    %1640 = vmatpush1.msra.mxu0 %v1621
    %1641 = vmatprep.subr.mxu0 0.0
    %1642 = vmatpush1.msra.mxu0 %v1622
    %1643 = vmatprep.subr.mxu0 0.0
    %1644 = vmatpush1.msra.mxu0 %v1623
    %1645 = vmatprep.subr.mxu0 0.0
    %1646 = vmatpush1.msra.mxu0 %v1624
    %1647 = vmatprep.subr.mxu0 0.0
    %1648 = vmatpush1.msra.mxu0 %v1625
    %1649 = vmatprep.subr.mxu0 0.0
    %1650 = vmatpush1.msra.mxu0 %v1626
    %1651 = vmatprep.subr.mxu0 0.0
    %1652 = vmatpush1.msra.mxu0 %v1627
    %1653 = vmatprep.subr.mxu0 0.0
    %1654 = vmatpush1.msra.mxu0 %v1628
    %1655 = vmatprep.subr.mxu0 0.0
    %1656 = vmatpush1.msra.mxu0 0.0
    %1657 = vmatprep.subr.mxu0 0.0
    %1658 = vmatpush1.msra.mxu0 0.0
    %1659 = vmatprep.subr.mxu0 0.0
    %1660 = vmatpush1.msra.mxu0 0.0
    %1661 = vmatprep.subr.mxu0 0.0
    %1662 = vmatpush1.msra.mxu0 0.0
    %1663 = vmatprep.subr.mxu0 0.0
    %1664 = vmatpush1.msra.mxu0 0.0
    %1665 = vmatprep.subr.mxu0 0.0
    %1666 = vmatpush1.msra.mxu0 0.0
    %1667 = vmatprep.subr.mxu0 0.0
    %1668 = vmatpush1.msra.mxu0 0.0
    %1669 = vmatprep.subr.mxu0 0.0
    %1670 = vmatpush1.msra.mxu0 0.0
    %1671 = vmatprep.subr.mxu0 0.0
    %1672 = vmatpush1.msra.mxu0 0.0
    %1673 = vmatprep.subr.mxu0 0.0
    %1674 = vmatpush1.msra.mxu0 0.0
    %1675 = vmatprep.subr.mxu0 0.0
    %1676 = vmatpush1.msra.mxu0 0.0
    %1677 = vmatprep.subr.mxu0 0.0
    %1678 = vmatpush1.msra.mxu0 0.0
    %1679 = vmatprep.subr.mxu0 0.0
    %1680 = vmatpush1.msra.mxu0 0.0
    %1681 = vmatprep.subr.mxu0 0.0
    %1682 = vmatpush1.msra.mxu0 0.0
    %1683 = vmatprep.subr.mxu0 0.0
    %1684 = vmatpush1.msra.mxu0 0.0
    %1685 = vmatprep.subr.mxu0 0.0
    %1686 = vmatpush1.msra.mxu0 0.0
    %1687 = vmatprep.subr.mxu0 0.0
    %1688 = vmatpush1.msra.mxu0 0.0
    %1689 = vmatprep.subr.mxu0 0.0
    %1690 = vmatpush1.msra.mxu0 0.0
    %1691 = vmatprep.subr.mxu0 0.0
    %1692 = vmatpush1.msra.mxu0 0.0
    %1693 = vmatprep.subr.mxu0 0.0
    %1694 = vmatpush1.msra.mxu0 0.0
    %1695 = vmatprep.subr.mxu0 0.0
    %1696 = vmatpush1.msra.mxu0 0.0
    %1697 = vmatprep.subr.mxu0 0.0
    %1698 = vmatpush1.msra.mxu0 0.0
    %1699 = vmatprep.subr.mxu0 0.0
    %1700 = vmatpush1.msra.mxu0 0.0
    %1701 = vmatprep.subr.mxu0 0.0
    %1702 = vmatpush1.msra.mxu0 0.0
    %1703 = vmatprep.mubr.f32.mxu0 0.0
    %1704 = vmatmul.mubr.f32.gmra.mrb[0].mxu0 %v1637
    %v1705 = vpop.f32.mrb[0].mxu0
    %v1706 = vadd.f32 %v1634, %v1705
    %v1707 = vpop.f32.mrb[0].mxu0
    %1708 = vdwg.mxu0
    %vm1709 = vcmp.gt.f32.partialorder %v1706, 0.0
    %v1710 = vmul.f32 %v1706, 0.1
    %v1711 = vsel %vm1709, %v1706, %v1710
    %vm1712 = vcmask 33792
    %v1713 = vsel %vm1712, %v1711, -inf
    %1714 = vmax.xlane.f32.xlu0 %v1713
    %v1715 = vpop.xlane.xlu0 %1714
    %v1716 = vsub.f32 %v1711, %v1715
    %v1717 = vmul.f32 %v1716, 1.442695
    %v1718 = vpow.pop %v1717
    %v1719 = vsel %vm1712, %v1718, 0.0
    %1720 = vadd.xlane.f32.xlu0 %v1719
    %v1721 = vpop.xlane.xlu0 %1720
    %v1722 = vrcp.pop %v1721
    %v1723 = vmul.f32 %v1718, %v1722
    %1724 = vst.msk [vmem:[#allocation2] sm:$0x3] %vm1712, %v1723
    // Predicated region
    $region38: #{net_forward.1} parent=1 // pred_check
      _
    $region39: #{net_forward.1} parent=1 // pred_check_branch
      %1726 = sbr.rel (0) target = $region41
    $region40: #{net_forward.1} parent=1 // pred_region
      %s1728 = ssub.s32 32, 32
      %1729 = vsyncadd [#allocation3], %s1728
      %s1731 = sshll.u32 [#allocation2], 4
      %s1732 = int_to_ptr.vmem [resolvable:$true] %s1731
      %1734 = dma.vmem_to_hbm [thread:$0]  %s1732, 32, %s9, [#allocation3]
    $region41: #{net_forward.1} parent=1 // pred_fallthru
      _
    // Predicated region
    $region42: #{net_forward.1} parent=1 // pred_check
      _
    $region43: #{net_forward.1} parent=1 // pred_check_branch
      %1736 = sbr.rel (0) target = $region45
    $region44: #{net_forward.1} parent=1 // pred_region
      %1737 = dma.done [#allocation3], 32
    $region45: #{net_forward.1} parent=1 // pred_fallthru
      _
    %1738 = vsyncpa [#allocation3], 1

</llo_original>
